<compile_context>
chip_gen: v7x
topology: tpu7x:2x2x1
jax: 0.10.0
libtpu: 0.0.40
codegen_flags: <defaults>
</compile_context>

<pallas_src>
import jax
import jax.numpy as jnp
import numpy as np
from jax.experimental import pallas as pl
from jax.experimental.pallas import tpu as pltpu

# ---- "cmd_args" hyper-parameters (gm == 'mean_field') ----
FEAT_DIM   = 8     # feat_dim  (number of node-tag types)
LATENT_DIM = 32    # latent_dim
OUT_DIM    = 32    # out_dim  (>0, so out_params Linear is used)
HIDDEN     = 32    # hidden
NUM_CLASS  = 2     # num_class
MAX_LV     = 3     # max_lv

# ---- batch geometry ----
NODES_PER_GRAPH = 16
NUM_GRAPHS      = 16
N_NODES         = NUM_GRAPHS * NODES_PER_GRAPH   # 256

LANE    = 128          # lane-dense width for every padded minor dim
NEG_BIG = -1e30        # finite "-inf": exp underflows to 0, never wins a max

# ---- packed weight-slab layout (bf16, all weight minor dims zero-padded to LANE) ----
R_WN2L  = 0                 # (FEAT_DIM, LANE)   s2v.w_n2l
R_WCONV = 16                # (LANE, LANE)       s2v.conv_params
R_WOUT  = R_WCONV + LANE    # 144                s2v.out_params
R_W1    = R_WOUT + LANE     # 272                mlp.h1_weights
R_W2    = R_W1 + LANE       # 400                mlp.h2_weights
R_BIAS  = R_W2 + LANE       # 528: rows 0..4 = bias hi parts, rows 8..12 = bias lo parts
SLAB_ROWS = R_BIAS + 16     # 544 (16-row aligned for bf16 sublane packing)


def classifier_kernel(node_feat_ref, n2n_ref, subg_ref, label_ref, w_ref, out_ref):
    f32 = jnp.float32
    bf16 = jnp.bfloat16

    def mm(a, b):
        # bf16 operands on the MXU, f32 accumulation.  astype is a no-op for
        # operands that are already bf16 (pre-cast inputs / packed weights).
        return jnp.dot(a.astype(bf16), b.astype(bf16), preferred_element_type=f32)

    # ---- hoisted, loop-invariant weight loads from the single packed bf16 slab ----
    w_n2l  = w_ref[R_WN2L:R_WN2L + FEAT_DIM, :]     # (FEAT_DIM, LANE)
    w_conv = w_ref[R_WCONV:R_WCONV + LANE, :]       # (LANE, LANE)
    w_out  = w_ref[R_WOUT:R_WOUT + LANE, :]         # (LANE, LANE)
    w_h1   = w_ref[R_W1:R_W1 + LANE, :]             # (LANE, LANE)
    w_h2   = w_ref[R_W2:R_W2 + LANE, :]             # (LANE, LANE)
    bias_blk = w_ref[R_BIAS:R_BIAS + 16, :].astype(f32)     # (16, LANE)
    biases = bias_blk[0:8, :] + bias_blk[8:16, :]           # hi + lo -> ~f32-accurate
    b_n2l  = biases[0:1, :]
    b_conv = biases[1:2, :]
    b_out  = biases[2:3, :]
    b_h1   = biases[3:4, :]
    b_h2   = biases[4:5, :]

    node_feat = node_feat_ref[...]   # (NB, FEAT_DIM) bf16 one-hot
    n2n       = n2n_ref[...]         # (NB, NB)       bf16 diagonal adjacency block
    subg      = subg_ref[...]        # (GB, NB)       bf16 membership block

    # ---------------- EmbedMeanField.mean_field (this block of graphs) ----------------
    input_message = mm(node_feat, w_n2l) + b_n2l     # (NB, LANE), real cols [0, LATENT_DIM)
    cur = jnp.maximum(input_message, 0.0)            # input_potential = relu(input_message)

    for _ in range(MAX_LV):                          # static unroll, weights hoisted
        n2npool = mm(n2n, cur)
        node_linear = mm(n2npool, w_conv) + b_conv
        cur = jnp.maximum(node_linear + input_message, 0.0)

    reluact = jnp.maximum(mm(cur, w_out) + b_out, 0.0)      # out_params + relu
    embed   = jnp.maximum(mm(subg, reluact), 0.0)           # (GB, LANE) sum-pooled

    # ---------------- MLPClassifier ----------------
    h1  = jnp.maximum(mm(embed, w_h1) + b_h1, 0.0)          # (GB, LANE)
    raw = mm(h1, w_h2) + b_h2                               # (GB, LANE)

    lane = jax.lax.broadcasted_iota(jnp.int32, raw.shape, 1)
    raw  = jnp.where(lane < NUM_CLASS, raw, NEG_BIG)        # mask padded lanes

    # log_softmax over the real classes
    m     = jnp.max(raw, axis=1, keepdims=True)
    lse   = m + jnp.log(jnp.sum(jnp.exp(raw - m), axis=1, keepdims=True))
    logsm = raw - lse

    # one-hot labels (lane-dense VMEM block) -> NLL is one multiply + lane reduce
    onehot = label_ref[...]                                  # (GB, LANE) f32
    per_graph_nll = -jnp.sum(onehot * logsm, axis=1, keepdims=True)      # (GB, 1)

    # first-index argmax == label
    maxv = jnp.max(logsm, axis=1, keepdims=True)
    pred = jnp.min(jnp.where(logsm == maxv, lane, LANE), axis=1, keepdims=True)
    lbl  = jnp.sum(jnp.where(onehot > 0.5, lane, 0), axis=1, keepdims=True)
    correct = (pred == lbl).astype(f32)                                  # (GB, 1)

    # single lane-dense output slab: lanes [0, NUM_CLASS) = log-probs,
    # lane NUM_CLASS = per-graph NLL, lane NUM_CLASS+1 = correct flag.
    out_ref[...] = jnp.where(lane < NUM_CLASS, logsm,
                    jnp.where(lane == NUM_CLASS, per_graph_nll,
                     jnp.where(lane == NUM_CLASS + 1, correct, 0.0)))


def _num_graph_blocks():
    # Two graph-blocks only help where there are two TensorCores to split across (v7x);
    # on single-TC parts (v5e/v6e) a 2-step grid is pure per-step overhead.
    try:
        kind = jax.devices()[0].device_kind.lower()
    except Exception:
        kind = ""
    return 2 if "v7" in kind else 1


def pack_param_slab(params):
    """Pack all weights/biases into one (SLAB_ROWS, LANE) bf16 slab (single DMA).

    Weight minor dims are zero-padded to LANE (exact: padded columns/rows contribute
    exact zeros).  Biases are stored as bf16 hi/lo pairs so the in-kernel hi+lo
    reconstruction is f32-accurate.
    """
    (wn2l, bn2l, wconv, bconv, wout, bout, w1, b1, w2, b2) = params
    slab = jnp.zeros((SLAB_ROWS, LANE), jnp.float32)
    slab = slab.at[R_WN2L:R_WN2L + FEAT_DIM, :LATENT_DIM].set(wn2l)
    slab = slab.at[R_WCONV:R_WCONV + LATENT_DIM, :LATENT_DIM].set(wconv)
    slab = slab.at[R_WOUT:R_WOUT + LATENT_DIM, :OUT_DIM].set(wout)
    slab = slab.at[R_W1:R_W1 + OUT_DIM, :HIDDEN].set(w1)
    slab = slab.at[R_W2:R_W2 + HIDDEN, :NUM_CLASS].set(w2)
    bias_list = [(bn2l, LATENT_DIM), (bconv, LATENT_DIM), (bout, OUT_DIM),
                 (b1, HIDDEN), (b2, NUM_CLASS)]
    for i, (b, width) in enumerate(bias_list):
        hi = b[0].astype(jnp.bfloat16).astype(jnp.float32)
        lo = b[0] - hi
        slab = slab.at[R_BIAS + i, :width].set(hi)
        slab = slab.at[R_BIAS + 8 + i, :width].set(lo)
    return slab.astype(jnp.bfloat16)


def classifier_forward(node_feat, n2n, subg, labels, params, num_blocks=None):
    if num_blocks is None:
        num_blocks = _num_graph_blocks()
    num_graphs = labels.shape[0]
    n_nodes = node_feat.shape[0]
    assert num_graphs % num_blocks == 0 and n_nodes % num_blocks == 0
    GB = num_graphs // num_blocks      # graphs per grid step
    NB = n_nodes // num_blocks         # nodes per grid step (multiple of 128)

    # exact-in-bf16 pre-casts (one-hot / 0-1 data): halve DMA bytes, drop in-kernel casts
    node_feat_b = node_feat.astype(jnp.bfloat16)
    n2n_b       = n2n.astype(jnp.bfloat16)
    subg_b      = subg.astype(jnp.bfloat16)
    slab        = pack_param_slab(params)
    label_onehot = jax.nn.one_hot(labels, LANE, dtype=jnp.float32)   # (G, LANE)

    grid_spec = pltpu.PrefetchScalarGridSpec(
        num_scalar_prefetch=0,
        grid=(num_blocks,),
        in_specs=[
            pl.BlockSpec((NB, FEAT_DIM),    lambda g: (g, 0)),
            pl.BlockSpec((NB, NB),          lambda g: (g, g)),   # diagonal adjacency block only
            pl.BlockSpec((GB, NB),          lambda g: (g, g)),   # diagonal membership block
            pl.BlockSpec((GB, LANE),        lambda g: (g, 0)),   # lane-dense one-hot labels
            pl.BlockSpec((SLAB_ROWS, LANE), lambda g: (0, 0)),   # packed weight slab (constant)
        ],
        out_specs=pl.BlockSpec((GB, LANE), lambda g: (g, 0)),
    )

    out_slab = pl.pallas_call(
        classifier_kernel,
        out_shape=jax.ShapeDtypeStruct((num_graphs, LANE), jnp.float32),
        grid_spec=grid_spec,
        compiler_params=pltpu.CompilerParams(
            dimension_semantics=("parallel",),   # graph-block axis -> 2 TCs on v7x
        ),
    )(node_feat_b, n2n_b, subg_b, label_onehot, slab)

    logits = out_slab[:, :NUM_CLASS]
    loss = jnp.mean(out_slab[:, NUM_CLASS])        # mean NLL
    acc  = jnp.mean(out_slab[:, NUM_CLASS + 1])    # mean accuracy
    return logits, loss, acc


def reference_forward(node_feat, n2n, subg, labels, params):
    """Pure-JAX reference with the same bf16-matmul / f32-accumulate precision."""
    (wn2l, bn2l, wconv, bconv, wout, bout, w1, b1, w2, b2) = params
    f32 = jnp.float32

    def mm(x, w):
        return jnp.dot(x.astype(jnp.bfloat16), w.astype(jnp.bfloat16),
                       preferred_element_type=f32)

    input_message = mm(node_feat, wn2l) + bn2l
    cur = jnp.maximum(input_message, 0.0)
    for _ in range(MAX_LV):
        n2npool = mm(n2n, cur)
        cur = jnp.maximum(mm(n2npool, wconv) + bconv + input_message, 0.0)
    reluact = jnp.maximum(mm(cur, wout) + bout, 0.0)
    embed = jnp.maximum(mm(subg, reluact), 0.0)
    h1 = jnp.maximum(mm(embed, w1) + b1, 0.0)
    raw = mm(h1, w2) + b2
    logsm = jax.nn.log_softmax(raw, axis=1)
    loss = -jnp.mean(logsm[jnp.arange(labels.shape[0]), labels])
    pred = jnp.argmax(logsm, axis=1)
    acc = jnp.mean((pred == labels).astype(f32))
    return logsm, loss, acc


def init_params(key):
    """Deterministic parameter init; Linear weights stored as (in, out) = W.T."""
    ks = jax.random.split(key, 5)
    scale = 0.1

    def lin(k, fan_in, fan_out):
        kw, kb = jax.random.split(k)
        w = scale * jax.random.normal(kw, (fan_in, fan_out), jnp.float32)
        b = scale * jax.random.normal(kb, (1, fan_out), jnp.float32)
        return w, b

    wn2l, bn2l   = lin(ks[0], FEAT_DIM, LATENT_DIM)    # s2v.w_n2l
    wconv, bconv = lin(ks[1], LATENT_DIM, LATENT_DIM)  # s2v.conv_params
    wout, bout   = lin(ks[2], LATENT_DIM, OUT_DIM)     # s2v.out_params
    w1, b1       = lin(ks[3], OUT_DIM, HIDDEN)         # mlp.h1_weights
    w2, b2       = lin(ks[4], HIDDEN, NUM_CLASS)       # mlp.h2_weights
    return (wn2l, bn2l, wconv, bconv, wout, bout, w1, b1, w2, b2)


def build_batch(key):
    """Dense equivalent of PrepareFeatureLabel + S2VLIB.PrepareMeanField."""
    k_tags, k_adj, k_lbl = jax.random.split(key, 3)

    # one-hot node features from node tags
    tags = jax.random.randint(k_tags, (N_NODES,), 0, FEAT_DIM)
    node_feat = jax.nn.one_hot(tags, FEAT_DIM, dtype=jnp.float32)

    # block-diagonal symmetric adjacency (no self loops), one block per graph
    n2n = jnp.zeros((N_NODES, N_NODES), jnp.float32)
    adj_keys = jax.random.split(k_adj, NUM_GRAPHS)
    for gidx in range(NUM_GRAPHS):
        blk = jax.random.bernoulli(
            adj_keys[gidx], 0.4, (NODES_PER_GRAPH, NODES_PER_GRAPH)
        ).astype(jnp.float32)
        blk = jnp.maximum(blk, blk.T)
        blk = blk * (1.0 - jnp.eye(NODES_PER_GRAPH, dtype=jnp.float32))
        s = gidx * NODES_PER_GRAPH
        n2n = n2n.at[s:s + NODES_PER_GRAPH, s:s + NODES_PER_GRAPH].set(blk)

    # graph membership (sum pooling) matrix
    subg = jnp.zeros((NUM_GRAPHS, N_NODES), jnp.float32)
    for gidx in range(NUM_GRAPHS):
        s = gidx * NODES_PER_GRAPH
        subg = subg.at[gidx, s:s + NODES_PER_GRAPH].set(1.0)

    labels = jax.random.randint(k_lbl, (NUM_GRAPHS,), 0, NUM_CLASS).astype(jnp.int32)
    return node_feat, n2n, subg, labels


if __name__ == "__main__":
    key = jax.random.PRNGKey(0)
    k_params, k_batch = jax.random.split(key)

    params = init_params(k_params)
    node_feat, n2n, subg, labels = build_batch(k_batch)

    logits, loss, acc = classifier_forward(node_feat, n2n, subg, labels, params)
    jax.block_until_ready((logits, loss, acc))

    ref_logits, ref_loss, ref_acc = reference_forward(node_feat, n2n, subg, labels, params)
    np.testing.assert_allclose(np.asarray(logits), np.asarray(ref_logits),
                               atol=2e-2, rtol=2e-2)
    np.testing.assert_allclose(float(loss), float(ref_loss), atol=2e-2, rtol=2e-2)
    np.testing.assert_allclose(float(acc), float(ref_acc), atol=1e-6)

    print("KERNEL_OK")
</pallas_src>

<mosaic_0001>
module attributes {stable_mosaic.version = 11 : i64} {
  func.func @classifier_kernel(%arg0: i32, %arg1: memref<256x8xbf16, #tpu.memory_space<vmem>>, %arg2: memref<256x256xbf16, #tpu.memory_space<vmem>>, %arg3: memref<16x256xbf16, #tpu.memory_space<vmem>>, %arg4: memref<16x128xf32, #tpu.memory_space<vmem>>, %arg5: memref<544x128xbf16, #tpu.memory_space<vmem>>, %arg6: memref<16x128xf32, #tpu.memory_space<vmem>>) attributes {dimension_semantics = [#tpu.dimension_semantics<parallel>], iteration_bounds = array<i64: 1>, scalar_prefetch = 0 : i64, scratch_operands = 0 : i64, tpu.core_type = #tpu.core_type<tc>, window_params = [{transform_indices = @transform_0, window_bounds = array<i64: 256, 8>}, {transform_indices = @transform_1, window_bounds = array<i64: 256, 256>}, {transform_indices = @transform_2, window_bounds = array<i64: 16, 256>}, {transform_indices = @transform_3, window_bounds = array<i64: 16, 128>}, {pipeline_mode = #tpu.pipeline_mode<synchronous>, transform_indices = @transform_4, window_bounds = array<i64: 544, 128>}, {transform_indices = @transform_5, window_bounds = array<i64: 16, 128>}]} {
    %c0 = arith.constant 0 : index
    %c0_0 = arith.constant 0 : index
    %0 = vector.load %arg5[%c0, %c0_0] : memref<544x128xbf16, #tpu.memory_space<vmem>>, vector<8x128xbf16>
    %c16 = arith.constant 16 : index
    %c0_1 = arith.constant 0 : index
    %1 = vector.load %arg5[%c16, %c0_1] : memref<544x128xbf16, #tpu.memory_space<vmem>>, vector<128x128xbf16>
    %c144 = arith.constant 144 : index
    %c0_2 = arith.constant 0 : index
    %2 = vector.load %arg5[%c144, %c0_2] : memref<544x128xbf16, #tpu.memory_space<vmem>>, vector<128x128xbf16>
    %c272 = arith.constant 272 : index
    %c0_3 = arith.constant 0 : index
    %3 = vector.load %arg5[%c272, %c0_3] : memref<544x128xbf16, #tpu.memory_space<vmem>>, vector<128x128xbf16>
    %c400 = arith.constant 400 : index
    %c0_4 = arith.constant 0 : index
    %4 = vector.load %arg5[%c400, %c0_4] : memref<544x128xbf16, #tpu.memory_space<vmem>>, vector<128x128xbf16>
    %c528 = arith.constant 528 : index
    %c0_5 = arith.constant 0 : index
    %5 = vector.load %arg5[%c528, %c0_5] : memref<544x128xbf16, #tpu.memory_space<vmem>>, vector<16x128xbf16>
    %6 = arith.extf %5 : vector<16x128xbf16> to vector<16x128xf32>
    %7 = vector.extract_strided_slice %6 {offsets = [0, 0], sizes = [8, 128], strides = [1, 1]} : vector<16x128xf32> to vector<8x128xf32>
    %8 = vector.extract_strided_slice %6 {offsets = [8, 0], sizes = [8, 128], strides = [1, 1]} : vector<16x128xf32> to vector<8x128xf32>
    %9 = arith.addf %7, %8 : vector<8x128xf32>
    %10 = vector.extract_strided_slice %9 {offsets = [0, 0], sizes = [1, 128], strides = [1, 1]} : vector<8x128xf32> to vector<1x128xf32>
    %11 = vector.extract_strided_slice %9 {offsets = [1, 0], sizes = [1, 128], strides = [1, 1]} : vector<8x128xf32> to vector<1x128xf32>
    %12 = vector.extract_strided_slice %9 {offsets = [2, 0], sizes = [1, 128], strides = [1, 1]} : vector<8x128xf32> to vector<1x128xf32>
    %13 = vector.extract_strided_slice %9 {offsets = [3, 0], sizes = [1, 128], strides = [1, 1]} : vector<8x128xf32> to vector<1x128xf32>
    %14 = vector.extract_strided_slice %9 {offsets = [4, 0], sizes = [1, 128], strides = [1, 1]} : vector<8x128xf32> to vector<1x128xf32>
    %c0_6 = arith.constant 0 : index
    %c0_7 = arith.constant 0 : index
    %15 = vector.load %arg1[%c0_6, %c0_7] : memref<256x8xbf16, #tpu.memory_space<vmem>>, vector<256x8xbf16>
    %c0_8 = arith.constant 0 : index
    %c0_9 = arith.constant 0 : index
    %16 = vector.load %arg2[%c0_8, %c0_9] : memref<256x256xbf16, #tpu.memory_space<vmem>>, vector<256x256xbf16>
    %c0_10 = arith.constant 0 : index
    %c0_11 = arith.constant 0 : index
    %17 = vector.load %arg3[%c0_10, %c0_11] : memref<16x256xbf16, #tpu.memory_space<vmem>>, vector<16x256xbf16>
    %cst = arith.constant dense<0.000000e+00> : vector<256x128xf32>
    %18 = tpu.matmul %15, %0, %cst {dimension_numbers = #tpu.dot_dimension_numbers<[1], [0], [0], [1], [0, 0, 1, 1], [], []>} : vector<256x8xbf16>, vector<8x128xbf16>, vector<256x128xf32> -> vector<256x128xf32>
    %19 = vector.broadcast %10 : vector<1x128xf32> to vector<256x128xf32>
    %20 = arith.addf %18, %19 : vector<256x128xf32>
    %cst_12 = arith.constant 0.000000e+00 : f32
    %21 = vector.broadcast %cst_12 : f32 to vector<256x128xf32>
    %22 = arith.maximumf %20, %21 : vector<256x128xf32>
    %23 = arith.truncf %22 : vector<256x128xf32> to vector<256x128xbf16>
    %cst_13 = arith.constant dense<0.000000e+00> : vector<256x128xf32>
    %24 = tpu.matmul %16, %23, %cst_13 {dimension_numbers = #tpu.dot_dimension_numbers<[1], [0], [0], [1], [0, 0, 1, 1], [], []>} : vector<256x256xbf16>, vector<256x128xbf16>, vector<256x128xf32> -> vector<256x128xf32>
    %25 = arith.truncf %24 : vector<256x128xf32> to vector<256x128xbf16>
    %cst_14 = arith.constant dense<0.000000e+00> : vector<256x128xf32>
    %26 = tpu.matmul %25, %1, %cst_14 {dimension_numbers = #tpu.dot_dimension_numbers<[1], [0], [0], [1], [0, 0, 1, 1], [], []>} : vector<256x128xbf16>, vector<128x128xbf16>, vector<256x128xf32> -> vector<256x128xf32>
    %27 = vector.broadcast %11 : vector<1x128xf32> to vector<256x128xf32>
    %28 = arith.addf %26, %27 : vector<256x128xf32>
    %29 = arith.addf %28, %20 : vector<256x128xf32>
    %cst_15 = arith.constant 0.000000e+00 : f32
    %30 = vector.broadcast %cst_15 : f32 to vector<256x128xf32>
    %31 = arith.maximumf %29, %30 : vector<256x128xf32>
    %32 = arith.truncf %31 : vector<256x128xf32> to vector<256x128xbf16>
    %cst_16 = arith.constant dense<0.000000e+00> : vector<256x128xf32>
    %33 = tpu.matmul %16, %32, %cst_16 {dimension_numbers = #tpu.dot_dimension_numbers<[1], [0], [0], [1], [0, 0, 1, 1], [], []>} : vector<256x256xbf16>, vector<256x128xbf16>, vector<256x128xf32> -> vector<256x128xf32>
    %34 = arith.truncf %33 : vector<256x128xf32> to vector<256x128xbf16>
    %cst_17 = arith.constant dense<0.000000e+00> : vector<256x128xf32>
    %35 = tpu.matmul %34, %1, %cst_17 {dimension_numbers = #tpu.dot_dimension_numbers<[1], [0], [0], [1], [0, 0, 1, 1], [], []>} : vector<256x128xbf16>, vector<128x128xbf16>, vector<256x128xf32> -> vector<256x128xf32>
    %36 = vector.broadcast %11 : vector<1x128xf32> to vector<256x128xf32>
    %37 = arith.addf %35, %36 : vector<256x128xf32>
    %38 = arith.addf %37, %20 : vector<256x128xf32>
    %cst_18 = arith.constant 0.000000e+00 : f32
    %39 = vector.broadcast %cst_18 : f32 to vector<256x128xf32>
    %40 = arith.maximumf %38, %39 : vector<256x128xf32>
    %41 = arith.truncf %40 : vector<256x128xf32> to vector<256x128xbf16>
    %cst_19 = arith.constant dense<0.000000e+00> : vector<256x128xf32>
    %42 = tpu.matmul %16, %41, %cst_19 {dimension_numbers = #tpu.dot_dimension_numbers<[1], [0], [0], [1], [0, 0, 1, 1], [], []>} : vector<256x256xbf16>, vector<256x128xbf16>, vector<256x128xf32> -> vector<256x128xf32>
    %43 = arith.truncf %42 : vector<256x128xf32> to vector<256x128xbf16>
    %cst_20 = arith.constant dense<0.000000e+00> : vector<256x128xf32>
    %44 = tpu.matmul %43, %1, %cst_20 {dimension_numbers = #tpu.dot_dimension_numbers<[1], [0], [0], [1], [0, 0, 1, 1], [], []>} : vector<256x128xbf16>, vector<128x128xbf16>, vector<256x128xf32> -> vector<256x128xf32>
    %45 = vector.broadcast %11 : vector<1x128xf32> to vector<256x128xf32>
    %46 = arith.addf %44, %45 : vector<256x128xf32>
    %47 = arith.addf %46, %20 : vector<256x128xf32>
    %cst_21 = arith.constant 0.000000e+00 : f32
    %48 = vector.broadcast %cst_21 : f32 to vector<256x128xf32>
    %49 = arith.maximumf %47, %48 : vector<256x128xf32>
    %50 = arith.truncf %49 : vector<256x128xf32> to vector<256x128xbf16>
    %cst_22 = arith.constant dense<0.000000e+00> : vector<256x128xf32>
    %51 = tpu.matmul %50, %2, %cst_22 {dimension_numbers = #tpu.dot_dimension_numbers<[1], [0], [0], [1], [0, 0, 1, 1], [], []>} : vector<256x128xbf16>, vector<128x128xbf16>, vector<256x128xf32> -> vector<256x128xf32>
    %52 = vector.broadcast %12 : vector<1x128xf32> to vector<256x128xf32>
    %53 = arith.addf %51, %52 : vector<256x128xf32>
    %cst_23 = arith.constant 0.000000e+00 : f32
    %54 = vector.broadcast %cst_23 : f32 to vector<256x128xf32>
    %55 = arith.maximumf %53, %54 : vector<256x128xf32>
    %56 = arith.truncf %55 : vector<256x128xf32> to vector<256x128xbf16>
    %cst_24 = arith.constant dense<0.000000e+00> : vector<16x128xf32>
    %57 = tpu.matmul %17, %56, %cst_24 {dimension_numbers = #tpu.dot_dimension_numbers<[1], [0], [0], [1], [0, 0, 1, 1], [], []>} : vector<16x256xbf16>, vector<256x128xbf16>, vector<16x128xf32> -> vector<16x128xf32>
    %cst_25 = arith.constant 0.000000e+00 : f32
    %58 = vector.broadcast %cst_25 : f32 to vector<16x128xf32>
    %59 = arith.maximumf %57, %58 : vector<16x128xf32>
    %60 = arith.truncf %59 : vector<16x128xf32> to vector<16x128xbf16>
    %cst_26 = arith.constant dense<0.000000e+00> : vector<16x128xf32>
    %61 = tpu.matmul %60, %3, %cst_26 {dimension_numbers = #tpu.dot_dimension_numbers<[1], [0], [0], [1], [0, 0, 1, 1], [], []>} : vector<16x128xbf16>, vector<128x128xbf16>, vector<16x128xf32> -> vector<16x128xf32>
    %62 = vector.broadcast %13 : vector<1x128xf32> to vector<16x128xf32>
    %63 = arith.addf %61, %62 : vector<16x128xf32>
    %cst_27 = arith.constant 0.000000e+00 : f32
    %64 = vector.broadcast %cst_27 : f32 to vector<16x128xf32>
    %65 = arith.maximumf %63, %64 : vector<16x128xf32>
    %66 = arith.truncf %65 : vector<16x128xf32> to vector<16x128xbf16>
    %cst_28 = arith.constant dense<0.000000e+00> : vector<16x128xf32>
    %67 = tpu.matmul %66, %4, %cst_28 {dimension_numbers = #tpu.dot_dimension_numbers<[1], [0], [0], [1], [0, 0, 1, 1], [], []>} : vector<16x128xbf16>, vector<128x128xbf16>, vector<16x128xf32> -> vector<16x128xf32>
    %68 = vector.broadcast %14 : vector<1x128xf32> to vector<16x128xf32>
    %69 = arith.addf %67, %68 : vector<16x128xf32>
    %70 = tpu.iota {dimensions = array<i32: 1>} : vector<16x128xi32>
    %c2_i32 = arith.constant 2 : i32
    %71 = vector.broadcast %c2_i32 : i32 to vector<16x128xi32>
    %72 = arith.cmpi slt, %70, %71 : vector<16x128xi32>
    %cst_29 = arith.constant -1.000000e+30 : f32
    %73 = vector.broadcast %cst_29 : f32 to vector<16x128xf32>
    %74 = arith.select %72, %69, %73 : vector<16x128xi1>, vector<16x128xf32>
    %cst_30 = arith.constant dense<0xFF800000> : vector<16xf32>
    %75 = vector.multi_reduction <maximumf>, %74, %cst_30 [1] : vector<16x128xf32> to vector<16xf32>
    %76 = vector.shape_cast %75 : vector<16xf32> to vector<16x1xf32>
    %77 = vector.broadcast %76 : vector<16x1xf32> to vector<16x128xf32>
    %78 = arith.subf %74, %77 : vector<16x128xf32>
    %79 = math.exp %78 : vector<16x128xf32>
    %cst_31 = arith.constant dense<0.000000e+00> : vector<16xf32>
    %80 = vector.multi_reduction <add>, %79, %cst_31 [1] : vector<16x128xf32> to vector<16xf32>
    %81 = vector.shape_cast %80 : vector<16xf32> to vector<16x1xf32>
    %82 = math.log %81 : vector<16x1xf32>
    %83 = arith.addf %76, %82 : vector<16x1xf32>
    %84 = vector.broadcast %83 : vector<16x1xf32> to vector<16x128xf32>
    %85 = arith.subf %74, %84 : vector<16x128xf32>
    %c0_32 = arith.constant 0 : index
    %c0_33 = arith.constant 0 : index
    %86 = vector.load %arg4[%c0_32, %c0_33] : memref<16x128xf32, #tpu.memory_space<vmem>>, vector<16x128xf32>
    %87 = arith.mulf %86, %85 : vector<16x128xf32>
    %cst_34 = arith.constant dense<0.000000e+00> : vector<16xf32>
    %88 = vector.multi_reduction <add>, %87, %cst_34 [1] : vector<16x128xf32> to vector<16xf32>
    %89 = vector.shape_cast %88 : vector<16xf32> to vector<16x1xf32>
    %cst_35 = arith.constant 0.000000e+00 : f32
    %90 = vector.broadcast %cst_35 : f32 to vector<16x1xf32>
    %91 = arith.subf %90, %89 : vector<16x1xf32>
    %cst_36 = arith.constant dense<0xFF800000> : vector<16xf32>
    %92 = vector.multi_reduction <maximumf>, %85, %cst_36 [1] : vector<16x128xf32> to vector<16xf32>
    %93 = vector.shape_cast %92 : vector<16xf32> to vector<16x1xf32>
    %94 = vector.broadcast %93 : vector<16x1xf32> to vector<16x128xf32>
    %95 = arith.cmpf oeq, %85, %94 : vector<16x128xf32>
    %c128_i32 = arith.constant 128 : i32
    %96 = vector.broadcast %c128_i32 : i32 to vector<16x128xi32>
    %97 = arith.select %95, %70, %96 : vector<16x128xi1>, vector<16x128xi32>
    %cst_37 = arith.constant dense<2147483647> : vector<16xi32>
    %98 = vector.multi_reduction <minsi>, %97, %cst_37 [1] : vector<16x128xi32> to vector<16xi32>
    %99 = vector.shape_cast %98 : vector<16xi32> to vector<16x1xi32>
    %cst_38 = arith.constant 5.000000e-01 : f32
    %100 = vector.broadcast %cst_38 : f32 to vector<16x128xf32>
    %101 = arith.cmpf ogt, %86, %100 : vector<16x128xf32>
    %c0_i32 = arith.constant 0 : i32
    %102 = vector.broadcast %c0_i32 : i32 to vector<16x128xi32>
    %103 = arith.select %101, %70, %102 : vector<16x128xi1>, vector<16x128xi32>
    %cst_39 = arith.constant dense<0> : vector<16xi32>
    %104 = vector.multi_reduction <add>, %103, %cst_39 [1] : vector<16x128xi32> to vector<16xi32>
    %105 = vector.shape_cast %104 : vector<16xi32> to vector<16x1xi32>
    %106 = arith.cmpi eq, %99, %105 : vector<16x1xi32>
    %107 = arith.extui %106 : vector<16x1xi1> to vector<16x1xi32>
    %108 = arith.sitofp %107 : vector<16x1xi32> to vector<16x1xf32>
    %c2_i32_40 = arith.constant 2 : i32
    %109 = vector.broadcast %c2_i32_40 : i32 to vector<16x128xi32>
    %110 = arith.cmpi slt, %70, %109 : vector<16x128xi32>
    %c2_i32_41 = arith.constant 2 : i32
    %111 = vector.broadcast %c2_i32_41 : i32 to vector<16x128xi32>
    %112 = arith.cmpi eq, %70, %111 : vector<16x128xi32>
    %c3_i32 = arith.constant 3 : i32
    %113 = vector.broadcast %c3_i32 : i32 to vector<16x128xi32>
    %114 = arith.cmpi eq, %70, %113 : vector<16x128xi32>
    %cst_42 = arith.constant 0.000000e+00 : f32
    %115 = vector.shape_cast %108 : vector<16x1xf32> to vector<16x1xf32>
    %116 = vector.broadcast %115 : vector<16x1xf32> to vector<16x128xf32>
    %117 = vector.broadcast %cst_42 : f32 to vector<16x128xf32>
    %118 = arith.select %114, %116, %117 : vector<16x128xi1>, vector<16x128xf32>
    %119 = vector.shape_cast %91 : vector<16x1xf32> to vector<16x1xf32>
    %120 = vector.broadcast %119 : vector<16x1xf32> to vector<16x128xf32>
    %121 = arith.select %112, %120, %118 : vector<16x128xi1>, vector<16x128xf32>
    %122 = arith.select %110, %85, %121 : vector<16x128xi1>, vector<16x128xf32>
    %c0_43 = arith.constant 0 : index
    %c0_44 = arith.constant 0 : index
    %123 = vector.load %arg6[%c0_43, %c0_44] : memref<16x128xf32, #tpu.memory_space<vmem>>, vector<16x128xf32>
    tpu.vector_store %arg6[%c0_43, %c0_44], %122 {strides = array<i32>} : memref<16x128xf32, #tpu.memory_space<vmem>>, vector<16x128xf32>,
    return
  }
  func.func @transform_0(%arg0: i32) -> (i32, i32) {
    %c0_i32 = arith.constant 0 : i32
    %c0_i32_0 = arith.constant 0 : i32
    return %arg0, %c0_i32 : i32, i32
  }
  func.func @transform_1(%arg0: i32) -> (i32, i32) {
    %c0_i32 = arith.constant 0 : i32
    return %arg0, %arg0 : i32, i32
  }
  func.func @transform_2(%arg0: i32) -> (i32, i32) {
    %c0_i32 = arith.constant 0 : i32
    return %arg0, %arg0 : i32, i32
  }
  func.func @transform_3(%arg0: i32) -> (i32, i32) {
    %c0_i32 = arith.constant 0 : i32
    %c0_i32_0 = arith.constant 0 : i32
    return %arg0, %c0_i32 : i32, i32
  }
  func.func @transform_4(%arg0: i32) -> (i32, i32) {
    %c0_i32 = arith.constant 0 : i32
    %c0_i32_0 = arith.constant 0 : i32
    %c0_i32_1 = arith.constant 0 : i32
    return %c0_i32, %c0_i32_0 : i32, i32
  }
  func.func @transform_5(%arg0: i32) -> (i32, i32) {
    %c0_i32 = arith.constant 0 : i32
    %c0_i32_0 = arith.constant 0 : i32
    return %arg0, %c0_i32 : i32, i32
  }
}

</mosaic_0001>

<llo_original>
// kernel: tpu_custom_call.1
$region0: #{tpu_custom_call.1}
  #allocation0 [shape = 'u32[]', space=smem, size = 0x4, offset = 0x4, fixed_abs, tag = 'smem constant byte address 0x4 - core index']
  #allocation1 [shape = 'u32[144,128]{1,0:T(1,128)}', space=vmem, size = 0x12000, scoped, tag = 'internal scratch']
  %s0 = inlined_call_operand.vmem [shape: bf16[256,8], index: 0, kind: input, shape index: {}]
  %s1 = inlined_call_operand.hbm [shape: bf16[256,256], index: 1, kind: input, shape index: {}]
  %s2 = inlined_call_operand.vmem [shape: bf16[16,256], index: 2, kind: input, shape index: {}]
  %s3 = inlined_call_operand.vmem [shape: f32[16,128], index: 3, kind: input, shape index: {}]
  %s4 = inlined_call_operand.hbm [shape: bf16[544,128], index: 4, kind: input, shape index: {}]
  %s5 = inlined_call_operand.hbm [shape: f32[16,128], index: 5, kind: output, shape index: {}]
  %s6 = sld [smem:[#allocation0]]
  $region38: #{tpu_custom_call.1} parent=0
    _
  %s8 = ssub.s32 1, %s6
  %s9 = scalar_select 0, %s8, %s6
  $region1: #{tpu_custom_call.1} parent=0
    #allocation2 [shape = 'u8[131072]{0}', space=vmem, size = 0x20000, scoped, tag = 'input window, operand 1, single buffered']
    #allocation3 [shape = 's32[1]{0}', space=sflag, size = 0x4, scoped, tag = 'scoped memory for tpu_custom_call.1']
    #allocation4 [shape = 's32[1]{0}', space=sflag, size = 0x4, scoped, tag = 'scoped memory for tpu_custom_call.1']
    #allocation5 [shape = 'u8[139264]{0}', space=vmem, size = 0x22000, scoped, tag = 'input window, operand 4, single buffered']
    #allocation6 [shape = 's32[1]{0}', space=sflag, size = 0x4, scoped, tag = 'scoped memory for tpu_custom_call.1']
    #allocation7 [shape = 'u8[8192]{0}', space=vmem, size = 0x2000, scoped, tag = 'output window, operand 0, single buffered']
    %10 = vsyncpa [#allocation3], 0
    %11 = vsyncpa [#allocation6], 0
    %12 = vsyncpa [#allocation4], 0
    // Predicated region
    $region2: #{tpu_custom_call.1} parent=1 // pred_check
      _
    $region3: #{tpu_custom_call.1} parent=1 // pred_check_branch
      %14 = sbr.rel (0) target = $region5
    $region4: #{tpu_custom_call.1} parent=1 // pred_region
      _
    $region5: #{tpu_custom_call.1} parent=1 // pred_fallthru
      _
    // Predicated region
    $region6: #{tpu_custom_call.1} parent=1 // pred_check
      _
    $region7: #{tpu_custom_call.1} parent=1 // pred_check_branch
      %16 = sbr.rel (0) target = $region9
    $region8: #{tpu_custom_call.1} parent=1 // pred_region
      %s18 = ssub.s32 4096, 4096
      %19 = vsyncadd [#allocation3], %s18
      %s20 = sshll.u32 [#allocation2], 4
      %s21 = int_to_ptr.vmem [resolvable:$true] %s20
      %26 = dma.hbm_to_vmem [thread:$0]  %s1, 4096, %s21, [#allocation3], 128, 128, 8
    $region9: #{tpu_custom_call.1} parent=1 // pred_fallthru
      _
    // Predicated region
    $region10: #{tpu_custom_call.1} parent=1 // pred_check
      _
    $region11: #{tpu_custom_call.1} parent=1 // pred_check_branch
      %28 = sbr.rel (0) target = $region13
    $region12: #{tpu_custom_call.1} parent=1 // pred_region
      _
    $region13: #{tpu_custom_call.1} parent=1 // pred_fallthru
      _
    // Predicated region
    $region14: #{tpu_custom_call.1} parent=1 // pred_check
      _
    $region15: #{tpu_custom_call.1} parent=1 // pred_check_branch
      %30 = sbr.rel (0) target = $region17
    $region16: #{tpu_custom_call.1} parent=1 // pred_region
      _
    $region17: #{tpu_custom_call.1} parent=1 // pred_fallthru
      _
    // Predicated region
    $region18: #{tpu_custom_call.1} parent=1 // pred_check
      _
    $region19: #{tpu_custom_call.1} parent=1 // pred_check_branch
      %32 = sbr.rel (0) target = $region21
    $region20: #{tpu_custom_call.1} parent=1 // pred_region
      %s34 = ssub.s32 4352, 4352
      %35 = vsyncadd [#allocation6], %s34
      %s36 = sshll.u32 [#allocation5], 4
      %s37 = int_to_ptr.vmem [resolvable:$true] %s36
      %42 = dma.hbm_to_vmem [thread:$0]  %s4, 4352, %s37, [#allocation6], 64, 64, 4
    $region21: #{tpu_custom_call.1} parent=1 // pred_fallthru
      _
    // Predicated region
    $region22: #{tpu_custom_call.1} parent=1 // pred_check
      _
    $region23: #{tpu_custom_call.1} parent=1 // pred_check_branch
      %44 = sbr.rel (0) target = $region25
    $region24: #{tpu_custom_call.1} parent=1 // pred_region
      %45 = dma.done [#allocation3], 4096
    $region25: #{tpu_custom_call.1} parent=1 // pred_fallthru
      _
    // Predicated region
    $region26: #{tpu_custom_call.1} parent=1 // pred_check
      _
    $region27: #{tpu_custom_call.1} parent=1 // pred_check_branch
      %47 = sbr.rel (0) target = $region29
    $region28: #{tpu_custom_call.1} parent=1 // pred_region
      %48 = dma.done [#allocation6], 4352
    $region29: #{tpu_custom_call.1} parent=1 // pred_fallthru
      _
    %v50 = vld [vmem:[#allocation5] sm:$0xf]
    %v51 = vld [vmem:[#allocation5 + $0x8] sm:$0xf]
    %v52 = vld [vmem:[#allocation5 + $0xc] sm:$0xf]
    %v53 = vld [vmem:[#allocation5 + $0x10] sm:$0xf]
    %v54 = vld [vmem:[#allocation5 + $0x14] sm:$0xf]
    %v55 = vld [vmem:[#allocation5 + $0x18] sm:$0xf]
    %v56 = vld [vmem:[#allocation5 + $0x1c] sm:$0xf]
    %v57 = vld [vmem:[#allocation5 + $0x20] sm:$0xf]
    %v58 = vld [vmem:[#allocation5 + $0x24] sm:$0xf]
    %v59 = vld [vmem:[#allocation5 + $0x28] sm:$0xf]
    %v60 = vld [vmem:[#allocation5 + $0x2c] sm:$0xf]
    %v61 = vld [vmem:[#allocation5 + $0x30] sm:$0xf]
    %v62 = vld [vmem:[#allocation5 + $0x34] sm:$0xf]
    %v63 = vld [vmem:[#allocation5 + $0x38] sm:$0xf]
    %v64 = vld [vmem:[#allocation5 + $0x3c] sm:$0xf]
    %v65 = vld [vmem:[#allocation5 + $0x40] sm:$0xf]
    %v66 = vld [vmem:[#allocation5 + $0x44] sm:$0xf]
    %v67 = vld [vmem:[#allocation5 + $0x48] sm:$0xf]
    %v68 = vld [vmem:[#allocation5 + $0x4c] sm:$0xf]
    %v69 = vld [vmem:[#allocation5 + $0x50] sm:$0xf]
    %v70 = vld [vmem:[#allocation5 + $0x54] sm:$0xf]
    %v71 = vld [vmem:[#allocation5 + $0x58] sm:$0xf]
    %v72 = vld [vmem:[#allocation5 + $0x5c] sm:$0xf]
    %v73 = vld [vmem:[#allocation5 + $0x60] sm:$0xf]
    %v74 = vld [vmem:[#allocation5 + $0x64] sm:$0xf]
    %v75 = vld [vmem:[#allocation5 + $0x68] sm:$0xf]
    %v76 = vld [vmem:[#allocation5 + $0x6c] sm:$0xf]
    %v77 = vld [vmem:[#allocation5 + $0x70] sm:$0xf]
    %v78 = vld [vmem:[#allocation5 + $0x74] sm:$0xf]
    %v79 = vld [vmem:[#allocation5 + $0x78] sm:$0xf]
    %v80 = vld [vmem:[#allocation5 + $0x7c] sm:$0xf]
    %v81 = vld [vmem:[#allocation5 + $0x80] sm:$0xf]
    %v82 = vld [vmem:[#allocation5 + $0x84] sm:$0xf]
    %v83 = vld [vmem:[#allocation5 + $0x88] sm:$0xf]
    %v84 = vld [vmem:[#allocation5 + $0x8c] sm:$0xf]
    %v85 = vld [vmem:[#allocation5 + $0x90] sm:$0xf]
    %v86 = vld [vmem:[#allocation5 + $0x94] sm:$0xf]
    %v87 = vld [vmem:[#allocation5 + $0x98] sm:$0xf]
    %v88 = vld [vmem:[#allocation5 + $0x9c] sm:$0xf]
    %v89 = vld [vmem:[#allocation5 + $0xa0] sm:$0xf]
    %v90 = vld [vmem:[#allocation5 + $0xa4] sm:$0xf]
    %v91 = vld [vmem:[#allocation5 + $0xa8] sm:$0xf]
    %v92 = vld [vmem:[#allocation5 + $0xac] sm:$0xf]
    %v93 = vld [vmem:[#allocation5 + $0xb0] sm:$0xf]
    %v94 = vld [vmem:[#allocation5 + $0xb4] sm:$0xf]
    %v95 = vld [vmem:[#allocation5 + $0xb8] sm:$0xf]
    %v96 = vld [vmem:[#allocation5 + $0xbc] sm:$0xf]
    %v97 = vld [vmem:[#allocation5 + $0xc0] sm:$0xf]
    %v98 = vld [vmem:[#allocation5 + $0xc4] sm:$0xf]
    %v99 = vld [vmem:[#allocation5 + $0xc8] sm:$0xf]
    %v100 = vld [vmem:[#allocation5 + $0xcc] sm:$0xf]
    %v101 = vld [vmem:[#allocation5 + $0xd0] sm:$0xf]
    %v102 = vld [vmem:[#allocation5 + $0xd4] sm:$0xf]
    %v103 = vld [vmem:[#allocation5 + $0xd8] sm:$0xf]
    %v104 = vld [vmem:[#allocation5 + $0xdc] sm:$0xf]
    %v105 = vld [vmem:[#allocation5 + $0xe0] sm:$0xf]
    %v106 = vld [vmem:[#allocation5 + $0xe4] sm:$0xf]
    %v107 = vld [vmem:[#allocation5 + $0xe8] sm:$0xf]
    %v108 = vld [vmem:[#allocation5 + $0xec] sm:$0xf]
    %v109 = vld [vmem:[#allocation5 + $0xf0] sm:$0xf]
    %v110 = vld [vmem:[#allocation5 + $0xf4] sm:$0xf]
    %v111 = vld [vmem:[#allocation5 + $0xf8] sm:$0xf]
    %v112 = vld [vmem:[#allocation5 + $0xfc] sm:$0xf]
    %v113 = vld [vmem:[#allocation5 + $0x100] sm:$0xf]
    %v114 = vld [vmem:[#allocation5 + $0x104] sm:$0xf]
    %v115 = vld [vmem:[#allocation5 + $0x108] sm:$0xf]
    %v116 = vld [vmem:[#allocation5 + $0x10c] sm:$0xf]
    %v117 = vunpack.c.l.bf16 %v115
    %v118 = vunpack.c.l.bf16 %v116
    %v119 = vadd.f32 %v117, %v118
    %v120 = vld [vmem:[%s0] sm:$0xf]
    %v121 = vld [vmem:[%s0 + $0x4] sm:$0xf]
    %v122 = vld [vmem:[%s0 + $0x8] sm:$0xf]
    %v123 = vld [vmem:[%s0 + $0xc] sm:$0xf]
    %v124 = vld [vmem:[%s0 + $0x10] sm:$0xf]
    %v125 = vld [vmem:[%s0 + $0x14] sm:$0xf]
    %v126 = vld [vmem:[%s0 + $0x18] sm:$0xf]
    %v127 = vld [vmem:[%s0 + $0x1c] sm:$0xf]
    %v128 = vld [vmem:[%s0 + $0x20] sm:$0xf]
    %v129 = vld [vmem:[%s0 + $0x24] sm:$0xf]
    %v130 = vld [vmem:[%s0 + $0x28] sm:$0xf]
    %v131 = vld [vmem:[%s0 + $0x2c] sm:$0xf]
    %v132 = vld [vmem:[%s0 + $0x30] sm:$0xf]
    %v133 = vld [vmem:[%s0 + $0x34] sm:$0xf]
    %v134 = vld [vmem:[%s0 + $0x38] sm:$0xf]
    %v135 = vld [vmem:[%s0 + $0x3c] sm:$0xf]
    %v136 = vld [vmem:[%s0 + $0x40] sm:$0xf]
    %v137 = vld [vmem:[%s0 + $0x44] sm:$0xf]
    %v138 = vld [vmem:[%s0 + $0x48] sm:$0xf]
    %v139 = vld [vmem:[%s0 + $0x4c] sm:$0xf]
    %v140 = vld [vmem:[%s0 + $0x50] sm:$0xf]
    %v141 = vld [vmem:[%s0 + $0x54] sm:$0xf]
    %v142 = vld [vmem:[%s0 + $0x58] sm:$0xf]
    %v143 = vld [vmem:[%s0 + $0x5c] sm:$0xf]
    %v144 = vld [vmem:[%s0 + $0x60] sm:$0xf]
    %v145 = vld [vmem:[%s0 + $0x64] sm:$0xf]
    %v146 = vld [vmem:[%s0 + $0x68] sm:$0xf]
    %v147 = vld [vmem:[%s0 + $0x6c] sm:$0xf]
    %v148 = vld [vmem:[%s0 + $0x70] sm:$0xf]
    %v149 = vld [vmem:[%s0 + $0x74] sm:$0xf]
    %v150 = vld [vmem:[%s0 + $0x78] sm:$0xf]
    %v151 = vld [vmem:[%s0 + $0x7c] sm:$0xf]
    %v152 = vld [vmem:[#allocation2] sm:$0xff]
    %v153 = vld [vmem:[#allocation2 + $0x8] sm:$0xff]
    %v154 = vld [vmem:[#allocation2 + $0x10] sm:$0xff]
    %v155 = vld [vmem:[#allocation2 + $0x18] sm:$0xff]
    %v156 = vld [vmem:[#allocation2 + $0x20] sm:$0xff]
    %v157 = vld [vmem:[#allocation2 + $0x28] sm:$0xff]
    %v158 = vld [vmem:[#allocation2 + $0x30] sm:$0xff]
    %v159 = vld [vmem:[#allocation2 + $0x38] sm:$0xff]
    %v160 = vld [vmem:[#allocation2 + $0x40] sm:$0xff]
    %v161 = vld [vmem:[#allocation2 + $0x48] sm:$0xff]
    %v162 = vld [vmem:[#allocation2 + $0x50] sm:$0xff]
    %v163 = vld [vmem:[#allocation2 + $0x58] sm:$0xff]
    %v164 = vld [vmem:[#allocation2 + $0x60] sm:$0xff]
    %v165 = vld [vmem:[#allocation2 + $0x68] sm:$0xff]
    %v166 = vld [vmem:[#allocation2 + $0x70] sm:$0xff]
    %v167 = vld [vmem:[#allocation2 + $0x78] sm:$0xff]
    %v168 = vld [vmem:[#allocation2 + $0x80] sm:$0xff]
    %v169 = vld [vmem:[#allocation2 + $0x88] sm:$0xff]
    %v170 = vld [vmem:[#allocation2 + $0x90] sm:$0xff]
    %v171 = vld [vmem:[#allocation2 + $0x98] sm:$0xff]
    %v172 = vld [vmem:[#allocation2 + $0xa0] sm:$0xff]
    %v173 = vld [vmem:[#allocation2 + $0xa8] sm:$0xff]
    %v174 = vld [vmem:[#allocation2 + $0xb0] sm:$0xff]
    %v175 = vld [vmem:[#allocation2 + $0xb8] sm:$0xff]
    %v176 = vld [vmem:[#allocation2 + $0xc0] sm:$0xff]
    %v177 = vld [vmem:[#allocation2 + $0xc8] sm:$0xff]
    %v178 = vld [vmem:[#allocation2 + $0xd0] sm:$0xff]
    %v179 = vld [vmem:[#allocation2 + $0xd8] sm:$0xff]
    %v180 = vld [vmem:[#allocation2 + $0xe0] sm:$0xff]
    %v181 = vld [vmem:[#allocation2 + $0xe8] sm:$0xff]
    %v182 = vld [vmem:[#allocation2 + $0xf0] sm:$0xff]
    %v183 = vld [vmem:[#allocation2 + $0xf8] sm:$0xff]
    %v184 = vld [vmem:[%s2] sm:$0xff]
    %v185 = vld [vmem:[%s2 + $0x8] sm:$0xff]
    %v186 = vlaneseq
    %v187 = vshrl.u32 %v186, 7
    %v188 = vsub.s32 0, %v187
    %v189 = vrot.slane %v119, %v188
    %v222 = vunpack.c.l.b16 %v120
    %v223 = vunpack.c.l.b16 %v121
    %v224 = vunpack.c.l.b16 %v122
    %v225 = vunpack.c.l.b16 %v123
    %v226 = vunpack.c.l.b16 %v124
    %v227 = vunpack.c.l.b16 %v125
    %v228 = vunpack.c.l.b16 %v126
    %v229 = vunpack.c.l.b16 %v127
    %v230 = vunpack.c.l.b16 %v128
    %v231 = vunpack.c.l.b16 %v129
    %v232 = vunpack.c.l.b16 %v130
    %v233 = vunpack.c.l.b16 %v131
    %v234 = vunpack.c.l.b16 %v132
    %v235 = vunpack.c.l.b16 %v133
    %v236 = vunpack.c.l.b16 %v134
    %v237 = vunpack.c.l.b16 %v135
    %v238 = vunpack.c.l.b16 %v136
    %v239 = vunpack.c.l.b16 %v137
    %v240 = vunpack.c.l.b16 %v138
    %v241 = vunpack.c.l.b16 %v139
    %v242 = vunpack.c.l.b16 %v140
    %v243 = vunpack.c.l.b16 %v141
    %v244 = vunpack.c.l.b16 %v142
    %v245 = vunpack.c.l.b16 %v143
    %v246 = vunpack.c.l.b16 %v144
    %v247 = vunpack.c.l.b16 %v145
    %v248 = vunpack.c.l.b16 %v146
    %v249 = vunpack.c.l.b16 %v147
    %v250 = vunpack.c.l.b16 %v148
    %v251 = vunpack.c.l.b16 %v149
    %v252 = vunpack.c.l.b16 %v150
    %v253 = vunpack.c.l.b16 %v151
    %v254 = vpack.c.b16 %v223, %v222
    %v255 = vpack.c.b16 %v225, %v224
    %v256 = vpack.c.b16 %v227, %v226
    %v257 = vpack.c.b16 %v229, %v228
    %v258 = vpack.c.b16 %v231, %v230
    %v259 = vpack.c.b16 %v233, %v232
    %v260 = vpack.c.b16 %v235, %v234
    %v261 = vpack.c.b16 %v237, %v236
    %v262 = vpack.c.b16 %v239, %v238
    %v263 = vpack.c.b16 %v241, %v240
    %v264 = vpack.c.b16 %v243, %v242
    %v265 = vpack.c.b16 %v245, %v244
    %v266 = vpack.c.b16 %v247, %v246
    %v267 = vpack.c.b16 %v249, %v248
    %v268 = vpack.c.b16 %v251, %v250
    %v269 = vpack.c.b16 %v253, %v252
    %vm270 = vcmask 64512
    %v272 = vsel %vm270, %v254, 0
    %v275 = vsel %vm270, %v255, 0
    %v278 = vsel %vm270, %v256, 0
    %v281 = vsel %vm270, %v257, 0
    %v284 = vsel %vm270, %v258, 0
    %v287 = vsel %vm270, %v259, 0
    %v290 = vsel %vm270, %v260, 0
    %v293 = vsel %vm270, %v261, 0
    %v296 = vsel %vm270, %v262, 0
    %v299 = vsel %vm270, %v263, 0
    %v302 = vsel %vm270, %v264, 0
    %v305 = vsel %vm270, %v265, 0
    %v308 = vsel %vm270, %v266, 0
    %v311 = vsel %vm270, %v267, 0
    %v314 = vsel %vm270, %v268, 0
    %v317 = vsel %vm270, %v269, 0
    %vm319 = vcmask 1043456
    %v321 = vsel %vm319, %v50, 0
    %323 = vmatprep.subr.bf16.mxu0 0
    %324 = vmatpush1.bf16.msra.mxu0 %v321
    %325 = vmatprep.subr.bf16.mxu0 0
    %326 = vmatpush1.bf16.msra.mxu0 0
    %327 = vmatprep.subr.bf16.mxu0 0
    %328 = vmatpush1.bf16.msra.mxu0 0
    %329 = vmatprep.subr.bf16.mxu0 0
    %330 = vmatpush1.bf16.msra.mxu0 0
    %331 = vmatprep.subr.bf16.mxu0 0
    %332 = vmatpush1.bf16.msra.mxu0 0
    %333 = vmatprep.subr.bf16.mxu0 0
    %334 = vmatpush1.bf16.msra.mxu0 0
    %335 = vmatprep.subr.bf16.mxu0 0
    %336 = vmatpush1.bf16.msra.mxu0 0
    %337 = vmatprep.subr.bf16.mxu0 0
    %338 = vmatpush1.bf16.msra.mxu0 0
    %339 = vmatprep.subr.bf16.mxu0 0
    %340 = vmatpush1.bf16.msra.mxu0 0
    %341 = vmatprep.subr.bf16.mxu0 0
    %342 = vmatpush1.bf16.msra.mxu0 0
    %343 = vmatprep.subr.bf16.mxu0 0
    %344 = vmatpush1.bf16.msra.mxu0 0
    %345 = vmatprep.subr.bf16.mxu0 0
    %346 = vmatpush1.bf16.msra.mxu0 0
    %347 = vmatprep.subr.bf16.mxu0 0
    %348 = vmatpush1.bf16.msra.mxu0 0
    %349 = vmatprep.subr.bf16.mxu0 0
    %350 = vmatpush1.bf16.msra.mxu0 0
    %351 = vmatprep.subr.bf16.mxu0 0
    %352 = vmatpush1.bf16.msra.mxu0 0
    %353 = vmatprep.subr.bf16.mxu0 0
    %354 = vmatpush1.bf16.msra.mxu0 0
    %355 = vmatprep.mubr.bf16.mxu0 0
    %356 = vmatmul.mubr.bf16.gmra.mrb[0].mxu0 %v272
    %v357 = vpop.f32.mrb[0].mxu0
    %v358 = vadd.f32 %v189, %v357
    %v359 = vpop.f32.mrb[0].mxu0
    %v360 = vpop.f32.mrb[0].mxu0
    %v361 = vadd.f32 %v189, %v360
    %v362 = vpop.f32.mrb[0].mxu0
    %363 = vmatprep.mubr.bf16.mxu0 0
    %364 = vmatmul.mubr.bf16.gmra.mrb[0].mxu0 %v275
    %v365 = vpop.f32.mrb[0].mxu0
    %v366 = vadd.f32 %v189, %v365
    %v367 = vpop.f32.mrb[0].mxu0
    %v368 = vpop.f32.mrb[0].mxu0
    %v369 = vadd.f32 %v189, %v368
    %v370 = vpop.f32.mrb[0].mxu0
    %371 = vmatprep.mubr.bf16.mxu0 0
    %372 = vmatmul.mubr.bf16.gmra.mrb[0].mxu0 %v278
    %v373 = vpop.f32.mrb[0].mxu0
    %v374 = vadd.f32 %v189, %v373
    %v375 = vpop.f32.mrb[0].mxu0
    %v376 = vpop.f32.mrb[0].mxu0
    %v377 = vadd.f32 %v189, %v376
    %v378 = vpop.f32.mrb[0].mxu0
    %379 = vmatprep.mubr.bf16.mxu0 0
    %380 = vmatmul.mubr.bf16.gmra.mrb[0].mxu0 %v281
    %v381 = vpop.f32.mrb[0].mxu0
    %v382 = vadd.f32 %v189, %v381
    %v383 = vpop.f32.mrb[0].mxu0
    %v384 = vpop.f32.mrb[0].mxu0
    %v385 = vadd.f32 %v189, %v384
    %v386 = vpop.f32.mrb[0].mxu0
    %387 = vmatprep.mubr.bf16.mxu0 0
    %388 = vmatmul.mubr.bf16.gmra.mrb[0].mxu0 %v284
    %v389 = vpop.f32.mrb[0].mxu0
    %v390 = vadd.f32 %v189, %v389
    %v391 = vpop.f32.mrb[0].mxu0
    %v392 = vpop.f32.mrb[0].mxu0
    %v393 = vadd.f32 %v189, %v392
    %v394 = vpop.f32.mrb[0].mxu0
    %395 = vmatprep.mubr.bf16.mxu0 0
    %396 = vmatmul.mubr.bf16.gmra.mrb[0].mxu0 %v287
    %v397 = vpop.f32.mrb[0].mxu0
    %v398 = vadd.f32 %v189, %v397
    %v399 = vpop.f32.mrb[0].mxu0
    %v400 = vpop.f32.mrb[0].mxu0
    %v401 = vadd.f32 %v189, %v400
    %v402 = vpop.f32.mrb[0].mxu0
    %403 = vmatprep.mubr.bf16.mxu0 0
    %404 = vmatmul.mubr.bf16.gmra.mrb[0].mxu0 %v290
    %v405 = vpop.f32.mrb[0].mxu0
    %v406 = vadd.f32 %v189, %v405
    %v407 = vpop.f32.mrb[0].mxu0
    %v408 = vpop.f32.mrb[0].mxu0
    %v409 = vadd.f32 %v189, %v408
    %v410 = vpop.f32.mrb[0].mxu0
    %411 = vmatprep.mubr.bf16.mxu0 0
    %412 = vmatmul.mubr.bf16.gmra.mrb[0].mxu0 %v293
    %v413 = vpop.f32.mrb[0].mxu0
    %v414 = vadd.f32 %v189, %v413
    %v415 = vpop.f32.mrb[0].mxu0
    %v416 = vpop.f32.mrb[0].mxu0
    %v417 = vadd.f32 %v189, %v416
    %v418 = vpop.f32.mrb[0].mxu0
    %419 = vmatprep.mubr.bf16.mxu0 0
    %420 = vmatmul.mubr.bf16.gmra.mrb[0].mxu0 %v296
    %v421 = vpop.f32.mrb[0].mxu0
    %v422 = vadd.f32 %v189, %v421
    %v423 = vpop.f32.mrb[0].mxu0
    %v424 = vpop.f32.mrb[0].mxu0
    %v425 = vadd.f32 %v189, %v424
    %v426 = vpop.f32.mrb[0].mxu0
    %427 = vmatprep.mubr.bf16.mxu0 0
    %428 = vmatmul.mubr.bf16.gmra.mrb[0].mxu0 %v299
    %v429 = vpop.f32.mrb[0].mxu0
    %v430 = vadd.f32 %v189, %v429
    %v431 = vpop.f32.mrb[0].mxu0
    %v432 = vpop.f32.mrb[0].mxu0
    %v433 = vadd.f32 %v189, %v432
    %v434 = vpop.f32.mrb[0].mxu0
    %435 = vmatprep.mubr.bf16.mxu0 0
    %436 = vmatmul.mubr.bf16.gmra.mrb[0].mxu0 %v302
    %v437 = vpop.f32.mrb[0].mxu0
    %v438 = vadd.f32 %v189, %v437
    %v439 = vpop.f32.mrb[0].mxu0
    %v440 = vpop.f32.mrb[0].mxu0
    %v441 = vadd.f32 %v189, %v440
    %v442 = vpop.f32.mrb[0].mxu0
    %443 = vmatprep.mubr.bf16.mxu0 0
    %444 = vmatmul.mubr.bf16.gmra.mrb[0].mxu0 %v305
    %v445 = vpop.f32.mrb[0].mxu0
    %v446 = vadd.f32 %v189, %v445
    %v447 = vpop.f32.mrb[0].mxu0
    %v448 = vpop.f32.mrb[0].mxu0
    %v449 = vadd.f32 %v189, %v448
    %v450 = vpop.f32.mrb[0].mxu0
    %451 = vmatprep.mubr.bf16.mxu0 0
    %452 = vmatmul.mubr.bf16.gmra.mrb[0].mxu0 %v308
    %v453 = vpop.f32.mrb[0].mxu0
    %v454 = vadd.f32 %v189, %v453
    %v455 = vpop.f32.mrb[0].mxu0
    %v456 = vpop.f32.mrb[0].mxu0
    %v457 = vadd.f32 %v189, %v456
    %v458 = vpop.f32.mrb[0].mxu0
    %459 = vmatprep.mubr.bf16.mxu0 0
    %460 = vmatmul.mubr.bf16.gmra.mrb[0].mxu0 %v311
    %v461 = vpop.f32.mrb[0].mxu0
    %v462 = vadd.f32 %v189, %v461
    %v463 = vpop.f32.mrb[0].mxu0
    %v464 = vpop.f32.mrb[0].mxu0
    %v465 = vadd.f32 %v189, %v464
    %v466 = vpop.f32.mrb[0].mxu0
    %467 = vmatprep.mubr.bf16.mxu0 0
    %468 = vmatmul.mubr.bf16.gmra.mrb[0].mxu0 %v314
    %v469 = vpop.f32.mrb[0].mxu0
    %v470 = vadd.f32 %v189, %v469
    %v471 = vpop.f32.mrb[0].mxu0
    %v472 = vpop.f32.mrb[0].mxu0
    %v473 = vadd.f32 %v189, %v472
    %v474 = vpop.f32.mrb[0].mxu0
    %475 = vmatprep.mubr.bf16.mxu0 0
    %476 = vmatmul.mubr.bf16.gmra.mrb[0].mxu0 %v317
    %v477 = vpop.f32.mrb[0].mxu0
    %v478 = vadd.f32 %v189, %v477
    %v479 = vpop.f32.mrb[0].mxu0
    %v480 = vpop.f32.mrb[0].mxu0
    %v481 = vadd.f32 %v189, %v480
    %v482 = vpop.f32.mrb[0].mxu0
    %483 = vdwg.mxu0
    %v484 = vmax.f32 %v358, 0.0
    %v485 = vmax.f32 %v361, 0.0
    %v486 = vmax.f32 %v366, 0.0
    %v487 = vmax.f32 %v369, 0.0
    %v488 = vmax.f32 %v374, 0.0
    %v489 = vmax.f32 %v377, 0.0
    %v490 = vmax.f32 %v382, 0.0
    %v491 = vmax.f32 %v385, 0.0
    %v492 = vmax.f32 %v390, 0.0
    %v493 = vmax.f32 %v393, 0.0
    %v494 = vmax.f32 %v398, 0.0
    %v495 = vmax.f32 %v401, 0.0
    %v496 = vmax.f32 %v406, 0.0
    %v497 = vmax.f32 %v409, 0.0
    %v498 = vmax.f32 %v414, 0.0
    %v499 = vmax.f32 %v417, 0.0
    %v500 = vmax.f32 %v422, 0.0
    %v501 = vmax.f32 %v425, 0.0
    %v502 = vmax.f32 %v430, 0.0
    %v503 = vmax.f32 %v433, 0.0
    %v504 = vmax.f32 %v438, 0.0
    %v505 = vmax.f32 %v441, 0.0
    %v506 = vmax.f32 %v446, 0.0
    %v507 = vmax.f32 %v449, 0.0
    %v508 = vmax.f32 %v454, 0.0
    %v509 = vmax.f32 %v457, 0.0
    %v510 = vmax.f32 %v462, 0.0
    %v511 = vmax.f32 %v465, 0.0
    %v512 = vmax.f32 %v470, 0.0
    %v513 = vmax.f32 %v473, 0.0
    %v514 = vmax.f32 %v478, 0.0
    %v515 = vmax.f32 %v481, 0.0
    %v516 = vpack.c.bf16 %v485, %v484
    %v517 = vpack.c.bf16 %v487, %v486
    %v518 = vpack.c.bf16 %v489, %v488
    %v519 = vpack.c.bf16 %v491, %v490
    %v520 = vpack.c.bf16 %v493, %v492
    %v521 = vpack.c.bf16 %v495, %v494
    %v522 = vpack.c.bf16 %v497, %v496
    %v523 = vpack.c.bf16 %v499, %v498
    %v524 = vpack.c.bf16 %v501, %v500
    %v525 = vpack.c.bf16 %v503, %v502
    %v526 = vpack.c.bf16 %v505, %v504
    %v527 = vpack.c.bf16 %v507, %v506
    %v528 = vpack.c.bf16 %v509, %v508
    %v529 = vpack.c.bf16 %v511, %v510
    %v530 = vpack.c.bf16 %v513, %v512
    %v531 = vpack.c.bf16 %v515, %v514
    %v564 = vunpack.c.l.b16 %v152
    %v565 = vunpack.c.h.b16 %v152
    %v566 = vunpack.c.l.b16 %v153
    %v567 = vunpack.c.h.b16 %v153
    %v568 = vunpack.c.l.b16 %v154
    %v569 = vunpack.c.h.b16 %v154
    %v570 = vunpack.c.l.b16 %v155
    %v571 = vunpack.c.h.b16 %v155
    %v572 = vunpack.c.l.b16 %v156
    %v573 = vunpack.c.h.b16 %v156
    %v574 = vunpack.c.l.b16 %v157
    %v575 = vunpack.c.h.b16 %v157
    %v576 = vunpack.c.l.b16 %v158
    %v577 = vunpack.c.h.b16 %v158
    %v578 = vunpack.c.l.b16 %v159
    %v579 = vunpack.c.h.b16 %v159
    %v580 = vunpack.c.l.b16 %v160
    %v581 = vunpack.c.h.b16 %v160
    %v582 = vunpack.c.l.b16 %v161
    %v583 = vunpack.c.h.b16 %v161
    %v584 = vunpack.c.l.b16 %v162
    %v585 = vunpack.c.h.b16 %v162
    %v586 = vunpack.c.l.b16 %v163
    %v587 = vunpack.c.h.b16 %v163
    %v588 = vunpack.c.l.b16 %v164
    %v589 = vunpack.c.h.b16 %v164
    %v590 = vunpack.c.l.b16 %v165
    %v591 = vunpack.c.h.b16 %v165
    %v592 = vunpack.c.l.b16 %v166
    %v593 = vunpack.c.h.b16 %v166
    %v594 = vunpack.c.l.b16 %v167
    %v595 = vunpack.c.h.b16 %v167
    %v596 = vunpack.c.l.b16 %v168
    %v597 = vunpack.c.h.b16 %v168
    %v598 = vunpack.c.l.b16 %v169
    %v599 = vunpack.c.h.b16 %v169
    %v600 = vunpack.c.l.b16 %v170
    %v601 = vunpack.c.h.b16 %v170
    %v602 = vunpack.c.l.b16 %v171
    %v603 = vunpack.c.h.b16 %v171
    %v604 = vunpack.c.l.b16 %v172
    %v605 = vunpack.c.h.b16 %v172
    %v606 = vunpack.c.l.b16 %v173
    %v607 = vunpack.c.h.b16 %v173
    %v608 = vunpack.c.l.b16 %v174
    %v609 = vunpack.c.h.b16 %v174
    %v610 = vunpack.c.l.b16 %v175
    %v611 = vunpack.c.h.b16 %v175
    %v612 = vunpack.c.l.b16 %v176
    %v613 = vunpack.c.h.b16 %v176
    %v614 = vunpack.c.l.b16 %v177
    %v615 = vunpack.c.h.b16 %v177
    %v616 = vunpack.c.l.b16 %v178
    %v617 = vunpack.c.h.b16 %v178
    %v618 = vunpack.c.l.b16 %v179
    %v619 = vunpack.c.h.b16 %v179
    %v620 = vunpack.c.l.b16 %v180
    %v621 = vunpack.c.h.b16 %v180
    %v622 = vunpack.c.l.b16 %v181
    %v623 = vunpack.c.h.b16 %v181
    %v624 = vunpack.c.l.b16 %v182
    %v625 = vunpack.c.h.b16 %v182
    %v626 = vunpack.c.l.b16 %v183
    %v627 = vunpack.c.h.b16 %v183
    %v628 = vpack.c.b16 %v566, %v564
    %v629 = vpack.c.b16 %v567, %v565
    %v630 = vpack.c.b16 %v570, %v568
    %v631 = vpack.c.b16 %v571, %v569
    %v632 = vpack.c.b16 %v574, %v572
    %v633 = vpack.c.b16 %v575, %v573
    %v634 = vpack.c.b16 %v578, %v576
    %v635 = vpack.c.b16 %v579, %v577
    %v636 = vpack.c.b16 %v582, %v580
    %v637 = vpack.c.b16 %v583, %v581
    %v638 = vpack.c.b16 %v586, %v584
    %v639 = vpack.c.b16 %v587, %v585
    %v640 = vpack.c.b16 %v590, %v588
    %v641 = vpack.c.b16 %v591, %v589
    %v642 = vpack.c.b16 %v594, %v592
    %v643 = vpack.c.b16 %v595, %v593
    %v644 = vpack.c.b16 %v598, %v596
    %v645 = vpack.c.b16 %v599, %v597
    %v646 = vpack.c.b16 %v602, %v600
    %v647 = vpack.c.b16 %v603, %v601
    %v648 = vpack.c.b16 %v606, %v604
    %v649 = vpack.c.b16 %v607, %v605
    %v650 = vpack.c.b16 %v610, %v608
    %v651 = vpack.c.b16 %v611, %v609
    %v652 = vpack.c.b16 %v614, %v612
    %v653 = vpack.c.b16 %v615, %v613
    %v654 = vpack.c.b16 %v618, %v616
    %v655 = vpack.c.b16 %v619, %v617
    %v656 = vpack.c.b16 %v622, %v620
    %v657 = vpack.c.b16 %v623, %v621
    %v658 = vpack.c.b16 %v626, %v624
    %v659 = vpack.c.b16 %v627, %v625
    %692 = vmatprep.subr.bf16.mxu0 0
    %693 = vmatpush1.bf16.msra.mxu0 %v516
    %694 = vmatprep.subr.bf16.mxu0 0
    %695 = vmatpush1.bf16.msra.mxu0 %v517
    %696 = vmatprep.subr.bf16.mxu0 0
    %697 = vmatpush1.bf16.msra.mxu0 %v518
    %698 = vmatprep.subr.bf16.mxu0 0
    %699 = vmatpush1.bf16.msra.mxu0 %v519
    %700 = vmatprep.subr.bf16.mxu0 0
    %701 = vmatpush1.bf16.msra.mxu0 %v520
    %702 = vmatprep.subr.bf16.mxu0 0
    %703 = vmatpush1.bf16.msra.mxu0 %v521
    %704 = vmatprep.subr.bf16.mxu0 0
    %705 = vmatpush1.bf16.msra.mxu0 %v522
    %706 = vmatprep.subr.bf16.mxu0 0
    %707 = vmatpush1.bf16.msra.mxu0 %v523
    %708 = vmatprep.subr.bf16.mxu0 0
    %709 = vmatpush1.bf16.msra.mxu0 %v524
    %710 = vmatprep.subr.bf16.mxu0 0
    %711 = vmatpush1.bf16.msra.mxu0 %v525
    %712 = vmatprep.subr.bf16.mxu0 0
    %713 = vmatpush1.bf16.msra.mxu0 %v526
    %714 = vmatprep.subr.bf16.mxu0 0
    %715 = vmatpush1.bf16.msra.mxu0 %v527
    %716 = vmatprep.subr.bf16.mxu0 0
    %717 = vmatpush1.bf16.msra.mxu0 %v528
    %718 = vmatprep.subr.bf16.mxu0 0
    %719 = vmatpush1.bf16.msra.mxu0 %v529
    %720 = vmatprep.subr.bf16.mxu0 0
    %721 = vmatpush1.bf16.msra.mxu0 %v530
    %722 = vmatprep.subr.bf16.mxu0 0
    %723 = vmatpush1.bf16.msra.mxu0 %v531
    %724 = vmatprep.mubr.bf16.mxu0 %v629
    %725 = vmatmul.mubr.bf16.gmra.mrb[0].mxu0 %v628
    %v726 = vpop.f32.mrb[0].mxu0
    %v727 = vadd.f32 0.0, %v726
    %v728 = vpop.f32.mrb[0].mxu0
    %v729 = vpop.f32.mrb[0].mxu0
    %v730 = vadd.f32 0.0, %v729
    %v731 = vpop.f32.mrb[0].mxu0
    %732 = vmatprep.mubr.bf16.mxu0 %v631
    %733 = vmatmul.mubr.bf16.gmra.mrb[0].mxu0 %v630
    %v734 = vpop.f32.mrb[0].mxu0
    %v735 = vadd.f32 0.0, %v734
    %v736 = vpop.f32.mrb[0].mxu0
    %v737 = vpop.f32.mrb[0].mxu0
    %v738 = vadd.f32 0.0, %v737
    %v739 = vpop.f32.mrb[0].mxu0
    %740 = vmatprep.mubr.bf16.mxu0 %v633
    %741 = vmatmul.mubr.bf16.gmra.mrb[0].mxu0 %v632
    %v742 = vpop.f32.mrb[0].mxu0
    %v743 = vadd.f32 0.0, %v742
    %v744 = vpop.f32.mrb[0].mxu0
    %v745 = vpop.f32.mrb[0].mxu0
    %v746 = vadd.f32 0.0, %v745
    %v747 = vpop.f32.mrb[0].mxu0
    %748 = vmatprep.mubr.bf16.mxu0 %v635
    %749 = vmatmul.mubr.bf16.gmra.mrb[0].mxu0 %v634
    %v750 = vpop.f32.mrb[0].mxu0
    %v751 = vadd.f32 0.0, %v750
    %v752 = vpop.f32.mrb[0].mxu0
    %v753 = vpop.f32.mrb[0].mxu0
    %v754 = vadd.f32 0.0, %v753
    %v755 = vpop.f32.mrb[0].mxu0
    %756 = vmatprep.mubr.bf16.mxu0 %v637
    %757 = vmatmul.mubr.bf16.gmra.mrb[0].mxu0 %v636
    %v758 = vpop.f32.mrb[0].mxu0
    %v759 = vadd.f32 0.0, %v758
    %v760 = vpop.f32.mrb[0].mxu0
    %v761 = vpop.f32.mrb[0].mxu0
    %v762 = vadd.f32 0.0, %v761
    %v763 = vpop.f32.mrb[0].mxu0
    %764 = vmatprep.mubr.bf16.mxu0 %v639
    %765 = vmatmul.mubr.bf16.gmra.mrb[0].mxu0 %v638
    %v766 = vpop.f32.mrb[0].mxu0
    %v767 = vadd.f32 0.0, %v766
    %v768 = vpop.f32.mrb[0].mxu0
    %v769 = vpop.f32.mrb[0].mxu0
    %v770 = vadd.f32 0.0, %v769
    %v771 = vpop.f32.mrb[0].mxu0
    %772 = vmatprep.mubr.bf16.mxu0 %v641
    %773 = vmatmul.mubr.bf16.gmra.mrb[0].mxu0 %v640
    %v774 = vpop.f32.mrb[0].mxu0
    %v775 = vadd.f32 0.0, %v774
    %v776 = vpop.f32.mrb[0].mxu0
    %v777 = vpop.f32.mrb[0].mxu0
    %v778 = vadd.f32 0.0, %v777
    %v779 = vpop.f32.mrb[0].mxu0
    %780 = vmatprep.mubr.bf16.mxu0 %v643
    %781 = vmatmul.mubr.bf16.gmra.mrb[0].mxu0 %v642
    %v782 = vpop.f32.mrb[0].mxu0
    %v783 = vadd.f32 0.0, %v782
    %v784 = vpop.f32.mrb[0].mxu0
    %v785 = vpop.f32.mrb[0].mxu0
    %v786 = vadd.f32 0.0, %v785
    %v787 = vpop.f32.mrb[0].mxu0
    %788 = vmatprep.mubr.bf16.mxu0 %v645
    %789 = vmatmul.mubr.bf16.gmra.mrb[0].mxu0 %v644
    %v790 = vpop.f32.mrb[0].mxu0
    %v791 = vadd.f32 0.0, %v790
    %v792 = vpop.f32.mrb[0].mxu0
    %v793 = vpop.f32.mrb[0].mxu0
    %v794 = vadd.f32 0.0, %v793
    %v795 = vpop.f32.mrb[0].mxu0
    %796 = vmatprep.mubr.bf16.mxu0 %v647
    %797 = vmatmul.mubr.bf16.gmra.mrb[0].mxu0 %v646
    %v798 = vpop.f32.mrb[0].mxu0
    %v799 = vadd.f32 0.0, %v798
    %v800 = vpop.f32.mrb[0].mxu0
    %v801 = vpop.f32.mrb[0].mxu0
    %v802 = vadd.f32 0.0, %v801
    %v803 = vpop.f32.mrb[0].mxu0
    %804 = vmatprep.mubr.bf16.mxu0 %v649
    %805 = vmatmul.mubr.bf16.gmra.mrb[0].mxu0 %v648
    %v806 = vpop.f32.mrb[0].mxu0
    %v807 = vadd.f32 0.0, %v806
    %v808 = vpop.f32.mrb[0].mxu0
    %v809 = vpop.f32.mrb[0].mxu0
    %v810 = vadd.f32 0.0, %v809
    %v811 = vpop.f32.mrb[0].mxu0
    %812 = vmatprep.mubr.bf16.mxu0 %v651
    %813 = vmatmul.mubr.bf16.gmra.mrb[0].mxu0 %v650
    %v814 = vpop.f32.mrb[0].mxu0
    %v815 = vadd.f32 0.0, %v814
    %v816 = vpop.f32.mrb[0].mxu0
    %v817 = vpop.f32.mrb[0].mxu0
    %v818 = vadd.f32 0.0, %v817
    %v819 = vpop.f32.mrb[0].mxu0
    %820 = vmatprep.mubr.bf16.mxu0 %v653
    %821 = vmatmul.mubr.bf16.gmra.mrb[0].mxu0 %v652
    %v822 = vpop.f32.mrb[0].mxu0
    %v823 = vadd.f32 0.0, %v822
    %v824 = vpop.f32.mrb[0].mxu0
    %v825 = vpop.f32.mrb[0].mxu0
    %v826 = vadd.f32 0.0, %v825
    %v827 = vpop.f32.mrb[0].mxu0
    %828 = vmatprep.mubr.bf16.mxu0 %v655
    %829 = vmatmul.mubr.bf16.gmra.mrb[0].mxu0 %v654
    %v830 = vpop.f32.mrb[0].mxu0
    %v831 = vadd.f32 0.0, %v830
    %v832 = vpop.f32.mrb[0].mxu0
    %v833 = vpop.f32.mrb[0].mxu0
    %v834 = vadd.f32 0.0, %v833
    %v835 = vpop.f32.mrb[0].mxu0
    %836 = vmatprep.mubr.bf16.mxu0 %v657
    %837 = vmatmul.mubr.bf16.gmra.mrb[0].mxu0 %v656
    %v838 = vpop.f32.mrb[0].mxu0
    %v839 = vadd.f32 0.0, %v838
    %v840 = vpop.f32.mrb[0].mxu0
    %v841 = vpop.f32.mrb[0].mxu0
    %v842 = vadd.f32 0.0, %v841
    %v843 = vpop.f32.mrb[0].mxu0
    %844 = vmatprep.mubr.bf16.mxu0 %v659
    %845 = vmatmul.mubr.bf16.gmra.mrb[0].mxu0 %v658
    %v846 = vpop.f32.mrb[0].mxu0
    %v847 = vadd.f32 0.0, %v846
    %v848 = vpop.f32.mrb[0].mxu0
    %v849 = vpop.f32.mrb[0].mxu0
    %v850 = vadd.f32 0.0, %v849
    %v851 = vpop.f32.mrb[0].mxu0
    %852 = vdwg.mxu0
    %v853 = vpack.c.bf16 %v730, %v727
    %v854 = vpack.c.bf16 %v738, %v735
    %v855 = vpack.c.bf16 %v746, %v743
    %v856 = vpack.c.bf16 %v754, %v751
    %v857 = vpack.c.bf16 %v762, %v759
    %v858 = vpack.c.bf16 %v770, %v767
    %v859 = vpack.c.bf16 %v778, %v775
    %v860 = vpack.c.bf16 %v786, %v783
    %v861 = vpack.c.bf16 %v794, %v791
    %v862 = vpack.c.bf16 %v802, %v799
    %v863 = vpack.c.bf16 %v810, %v807
    %v864 = vpack.c.bf16 %v818, %v815
    %v865 = vpack.c.bf16 %v826, %v823
    %v866 = vpack.c.bf16 %v834, %v831
    %v867 = vpack.c.bf16 %v842, %v839
    %v868 = vpack.c.bf16 %v850, %v847
    %v869 = vlaneseq
    %v870 = vshrl.u32 %v869, 7
    %v871 = vsub.s32 1, %v870
    %v872 = vrot.slane %v119, %v871
    %v889 = vunpack.c.l.b16 %v51
    %v890 = vunpack.c.l.b16 %v52
    %v891 = vunpack.c.l.b16 %v53
    %v892 = vunpack.c.l.b16 %v54
    %v893 = vunpack.c.l.b16 %v55
    %v894 = vunpack.c.l.b16 %v56
    %v895 = vunpack.c.l.b16 %v57
    %v896 = vunpack.c.l.b16 %v58
    %v897 = vunpack.c.l.b16 %v59
    %v898 = vunpack.c.l.b16 %v60
    %v899 = vunpack.c.l.b16 %v61
    %v900 = vunpack.c.l.b16 %v62
    %v901 = vunpack.c.l.b16 %v63
    %v902 = vunpack.c.l.b16 %v64
    %v903 = vunpack.c.l.b16 %v65
    %v904 = vunpack.c.l.b16 %v66
    %v905 = vpack.c.b16 %v890, %v889
    %v906 = vpack.c.b16 %v892, %v891
    %v907 = vpack.c.b16 %v894, %v893
    %v908 = vpack.c.b16 %v896, %v895
    %v909 = vpack.c.b16 %v898, %v897
    %v910 = vpack.c.b16 %v900, %v899
    %v911 = vpack.c.b16 %v902, %v901
    %v912 = vpack.c.b16 %v904, %v903
    %921 = vmatprep.subr.bf16.mxu0 0
    %922 = vmatpush1.bf16.msra.mxu0 %v905
    %923 = vmatprep.subr.bf16.mxu0 0
    %924 = vmatpush1.bf16.msra.mxu0 %v906
    %925 = vmatprep.subr.bf16.mxu0 0
    %926 = vmatpush1.bf16.msra.mxu0 %v907
    %927 = vmatprep.subr.bf16.mxu0 0
    %928 = vmatpush1.bf16.msra.mxu0 %v908
    %929 = vmatprep.subr.bf16.mxu0 0
    %930 = vmatpush1.bf16.msra.mxu0 %v909
    %931 = vmatprep.subr.bf16.mxu0 0
    %932 = vmatpush1.bf16.msra.mxu0 %v910
    %933 = vmatprep.subr.bf16.mxu0 0
    %934 = vmatpush1.bf16.msra.mxu0 %v911
    %935 = vmatprep.subr.bf16.mxu0 0
    %936 = vmatpush1.bf16.msra.mxu0 %v912
    %937 = vmatprep.subr.bf16.mxu0 0
    %938 = vmatpush1.bf16.msra.mxu0 0
    %939 = vmatprep.subr.bf16.mxu0 0
    %940 = vmatpush1.bf16.msra.mxu0 0
    %941 = vmatprep.subr.bf16.mxu0 0
    %942 = vmatpush1.bf16.msra.mxu0 0
    %943 = vmatprep.subr.bf16.mxu0 0
    %944 = vmatpush1.bf16.msra.mxu0 0
    %945 = vmatprep.subr.bf16.mxu0 0
    %946 = vmatpush1.bf16.msra.mxu0 0
    %947 = vmatprep.subr.bf16.mxu0 0
    %948 = vmatpush1.bf16.msra.mxu0 0
    %949 = vmatprep.subr.bf16.mxu0 0
    %950 = vmatpush1.bf16.msra.mxu0 0
    %951 = vmatprep.subr.bf16.mxu0 0
    %952 = vmatpush1.bf16.msra.mxu0 0
    %953 = vmatprep.mubr.bf16.mxu0 0
    %954 = vmatmul.mubr.bf16.gmra.mrb[0].mxu0 %v853
    %v955 = vpop.f32.mrb[0].mxu0
    %v956 = vadd.f32 %v872, %v955
    %v957 = vpop.f32.mrb[0].mxu0
    %v958 = vpop.f32.mrb[0].mxu0
    %v959 = vadd.f32 %v872, %v958
    %v960 = vpop.f32.mrb[0].mxu0
    %961 = vmatprep.mubr.bf16.mxu0 0
    %962 = vmatmul.mubr.bf16.gmra.mrb[0].mxu0 %v854
    %v963 = vpop.f32.mrb[0].mxu0
    %v964 = vadd.f32 %v872, %v963
    %v965 = vpop.f32.mrb[0].mxu0
    %v966 = vpop.f32.mrb[0].mxu0
    %v967 = vadd.f32 %v872, %v966
    %v968 = vpop.f32.mrb[0].mxu0
    %969 = vmatprep.mubr.bf16.mxu0 0
    %970 = vmatmul.mubr.bf16.gmra.mrb[0].mxu0 %v855
    %v971 = vpop.f32.mrb[0].mxu0
    %v972 = vadd.f32 %v872, %v971
    %v973 = vpop.f32.mrb[0].mxu0
    %v974 = vpop.f32.mrb[0].mxu0
    %v975 = vadd.f32 %v872, %v974
    %v976 = vpop.f32.mrb[0].mxu0
    %977 = vmatprep.mubr.bf16.mxu0 0
    %978 = vmatmul.mubr.bf16.gmra.mrb[0].mxu0 %v856
    %v979 = vpop.f32.mrb[0].mxu0
    %v980 = vadd.f32 %v872, %v979
    %v981 = vpop.f32.mrb[0].mxu0
    %v982 = vpop.f32.mrb[0].mxu0
    %v983 = vadd.f32 %v872, %v982
    %v984 = vpop.f32.mrb[0].mxu0
    %985 = vmatprep.mubr.bf16.mxu0 0
    %986 = vmatmul.mubr.bf16.gmra.mrb[0].mxu0 %v857
    %v987 = vpop.f32.mrb[0].mxu0
    %v988 = vadd.f32 %v872, %v987
    %v989 = vpop.f32.mrb[0].mxu0
    %v990 = vpop.f32.mrb[0].mxu0
    %v991 = vadd.f32 %v872, %v990
    %v992 = vpop.f32.mrb[0].mxu0
    %993 = vmatprep.mubr.bf16.mxu0 0
    %994 = vmatmul.mubr.bf16.gmra.mrb[0].mxu0 %v858
    %v995 = vpop.f32.mrb[0].mxu0
    %v996 = vadd.f32 %v872, %v995
    %v997 = vpop.f32.mrb[0].mxu0
    %v998 = vpop.f32.mrb[0].mxu0
    %v999 = vadd.f32 %v872, %v998
    %v1000 = vpop.f32.mrb[0].mxu0
    %1001 = vmatprep.mubr.bf16.mxu0 0
    %1002 = vmatmul.mubr.bf16.gmra.mrb[0].mxu0 %v859
    %v1003 = vpop.f32.mrb[0].mxu0
    %v1004 = vadd.f32 %v872, %v1003
    %v1005 = vpop.f32.mrb[0].mxu0
    %v1006 = vpop.f32.mrb[0].mxu0
    %v1007 = vadd.f32 %v872, %v1006
    %v1008 = vpop.f32.mrb[0].mxu0
    %1009 = vmatprep.mubr.bf16.mxu0 0
    %1010 = vmatmul.mubr.bf16.gmra.mrb[0].mxu0 %v860
    %v1011 = vpop.f32.mrb[0].mxu0
    %v1012 = vadd.f32 %v872, %v1011
    %v1013 = vpop.f32.mrb[0].mxu0
    %v1014 = vpop.f32.mrb[0].mxu0
    %v1015 = vadd.f32 %v872, %v1014
    %v1016 = vpop.f32.mrb[0].mxu0
    %1017 = vmatprep.mubr.bf16.mxu0 0
    %1018 = vmatmul.mubr.bf16.gmra.mrb[0].mxu0 %v861
    %v1019 = vpop.f32.mrb[0].mxu0
    %v1020 = vadd.f32 %v872, %v1019
    %v1021 = vpop.f32.mrb[0].mxu0
    %v1022 = vpop.f32.mrb[0].mxu0
    %v1023 = vadd.f32 %v872, %v1022
    %v1024 = vpop.f32.mrb[0].mxu0
    %1025 = vmatprep.mubr.bf16.mxu0 0
    %1026 = vmatmul.mubr.bf16.gmra.mrb[0].mxu0 %v862
    %v1027 = vpop.f32.mrb[0].mxu0
    %v1028 = vadd.f32 %v872, %v1027
    %v1029 = vpop.f32.mrb[0].mxu0
    %v1030 = vpop.f32.mrb[0].mxu0
    %v1031 = vadd.f32 %v872, %v1030
    %v1032 = vpop.f32.mrb[0].mxu0
    %1033 = vmatprep.mubr.bf16.mxu0 0
    %1034 = vmatmul.mubr.bf16.gmra.mrb[0].mxu0 %v863
    %v1035 = vpop.f32.mrb[0].mxu0
    %v1036 = vadd.f32 %v872, %v1035
    %v1037 = vpop.f32.mrb[0].mxu0
    %v1038 = vpop.f32.mrb[0].mxu0
    %v1039 = vadd.f32 %v872, %v1038
    %v1040 = vpop.f32.mrb[0].mxu0
    %1041 = vmatprep.mubr.bf16.mxu0 0
    %1042 = vmatmul.mubr.bf16.gmra.mrb[0].mxu0 %v864
    %v1043 = vpop.f32.mrb[0].mxu0
    %v1044 = vadd.f32 %v872, %v1043
    %v1045 = vpop.f32.mrb[0].mxu0
    %v1046 = vpop.f32.mrb[0].mxu0
    %v1047 = vadd.f32 %v872, %v1046
    %v1048 = vpop.f32.mrb[0].mxu0
    %1049 = vmatprep.mubr.bf16.mxu0 0
    %1050 = vmatmul.mubr.bf16.gmra.mrb[0].mxu0 %v865
    %v1051 = vpop.f32.mrb[0].mxu0
    %v1052 = vadd.f32 %v872, %v1051
    %v1053 = vpop.f32.mrb[0].mxu0
    %v1054 = vpop.f32.mrb[0].mxu0
    %v1055 = vadd.f32 %v872, %v1054
    %v1056 = vpop.f32.mrb[0].mxu0
    %1057 = vmatprep.mubr.bf16.mxu0 0
    %1058 = vmatmul.mubr.bf16.gmra.mrb[0].mxu0 %v866
    %v1059 = vpop.f32.mrb[0].mxu0
    %v1060 = vadd.f32 %v872, %v1059
    %v1061 = vpop.f32.mrb[0].mxu0
    %v1062 = vpop.f32.mrb[0].mxu0
    %v1063 = vadd.f32 %v872, %v1062
    %v1064 = vpop.f32.mrb[0].mxu0
    %1065 = vmatprep.mubr.bf16.mxu0 0
    %1066 = vmatmul.mubr.bf16.gmra.mrb[0].mxu0 %v867
    %v1067 = vpop.f32.mrb[0].mxu0
    %v1068 = vadd.f32 %v872, %v1067
    %v1069 = vpop.f32.mrb[0].mxu0
    %v1070 = vpop.f32.mrb[0].mxu0
    %v1071 = vadd.f32 %v872, %v1070
    %v1072 = vpop.f32.mrb[0].mxu0
    %1073 = vmatprep.mubr.bf16.mxu0 0
    %1074 = vmatmul.mubr.bf16.gmra.mrb[0].mxu0 %v868
    %v1075 = vpop.f32.mrb[0].mxu0
    %v1076 = vadd.f32 %v872, %v1075
    %v1077 = vpop.f32.mrb[0].mxu0
    %v1078 = vpop.f32.mrb[0].mxu0
    %v1079 = vadd.f32 %v872, %v1078
    %v1080 = vpop.f32.mrb[0].mxu0
    %1081 = vdwg.mxu0
    %v1082 = vadd.f32 %v956, %v358
    %v1083 = vadd.f32 %v959, %v361
    %v1084 = vadd.f32 %v964, %v366
    %v1085 = vadd.f32 %v967, %v369
    %v1086 = vadd.f32 %v972, %v374
    %v1087 = vadd.f32 %v975, %v377
    %v1088 = vadd.f32 %v980, %v382
    %v1089 = vadd.f32 %v983, %v385
    %v1090 = vadd.f32 %v988, %v390
    %v1091 = vadd.f32 %v991, %v393
    %v1092 = vadd.f32 %v996, %v398
    %v1093 = vadd.f32 %v999, %v401
    %v1094 = vadd.f32 %v1004, %v406
    %v1095 = vadd.f32 %v1007, %v409
    %v1096 = vadd.f32 %v1012, %v414
    %v1097 = vadd.f32 %v1015, %v417
    %v1098 = vadd.f32 %v1020, %v422
    %v1099 = vadd.f32 %v1023, %v425
    %v1100 = vadd.f32 %v1028, %v430
    %v1101 = vadd.f32 %v1031, %v433
    %v1102 = vadd.f32 %v1036, %v438
    %v1103 = vadd.f32 %v1039, %v441
    %v1104 = vadd.f32 %v1044, %v446
    %v1105 = vadd.f32 %v1047, %v449
    %v1106 = vadd.f32 %v1052, %v454
    %v1107 = vadd.f32 %v1055, %v457
    %v1108 = vadd.f32 %v1060, %v462
    %v1109 = vadd.f32 %v1063, %v465
    %v1110 = vadd.f32 %v1068, %v470
    %v1111 = vadd.f32 %v1071, %v473
    %v1112 = vadd.f32 %v1076, %v478
    %v1113 = vadd.f32 %v1079, %v481
    %v1114 = vmax.f32 %v1082, 0.0
    %v1115 = vmax.f32 %v1083, 0.0
    %v1116 = vmax.f32 %v1084, 0.0
    %v1117 = vmax.f32 %v1085, 0.0
    %v1118 = vmax.f32 %v1086, 0.0
    %v1119 = vmax.f32 %v1087, 0.0
    %v1120 = vmax.f32 %v1088, 0.0
    %v1121 = vmax.f32 %v1089, 0.0
    %v1122 = vmax.f32 %v1090, 0.0
    %v1123 = vmax.f32 %v1091, 0.0
    %v1124 = vmax.f32 %v1092, 0.0
    %v1125 = vmax.f32 %v1093, 0.0
    %v1126 = vmax.f32 %v1094, 0.0
    %v1127 = vmax.f32 %v1095, 0.0
    %v1128 = vmax.f32 %v1096, 0.0
    %v1129 = vmax.f32 %v1097, 0.0
    %v1130 = vmax.f32 %v1098, 0.0
    %v1131 = vmax.f32 %v1099, 0.0
    %v1132 = vmax.f32 %v1100, 0.0
    %v1133 = vmax.f32 %v1101, 0.0
    %v1134 = vmax.f32 %v1102, 0.0
    %v1135 = vmax.f32 %v1103, 0.0
    %v1136 = vmax.f32 %v1104, 0.0
    %v1137 = vmax.f32 %v1105, 0.0
    %v1138 = vmax.f32 %v1106, 0.0
    %v1139 = vmax.f32 %v1107, 0.0
    %v1140 = vmax.f32 %v1108, 0.0
    %v1141 = vmax.f32 %v1109, 0.0
    %v1142 = vmax.f32 %v1110, 0.0
    %v1143 = vmax.f32 %v1111, 0.0
    %v1144 = vmax.f32 %v1112, 0.0
    %v1145 = vmax.f32 %v1113, 0.0
    %v1146 = vpack.c.bf16 %v1115, %v1114
    %v1147 = vpack.c.bf16 %v1117, %v1116
    %v1148 = vpack.c.bf16 %v1119, %v1118
    %v1149 = vpack.c.bf16 %v1121, %v1120
    %v1150 = vpack.c.bf16 %v1123, %v1122
    %v1151 = vpack.c.bf16 %v1125, %v1124
    %v1152 = vpack.c.bf16 %v1127, %v1126
    %v1153 = vpack.c.bf16 %v1129, %v1128
    %v1154 = vpack.c.bf16 %v1131, %v1130
    %v1155 = vpack.c.bf16 %v1133, %v1132
    %v1156 = vpack.c.bf16 %v1135, %v1134
    %v1157 = vpack.c.bf16 %v1137, %v1136
    %v1158 = vpack.c.bf16 %v1139, %v1138
    %v1159 = vpack.c.bf16 %v1141, %v1140
    %v1160 = vpack.c.bf16 %v1143, %v1142
    %v1161 = vpack.c.bf16 %v1145, %v1144
    %1162 = vmatprep.subr.bf16.mxu0 0
    %1163 = vmatpush1.bf16.msra.mxu0 %v1146
    %1164 = vmatprep.subr.bf16.mxu0 0
    %1165 = vmatpush1.bf16.msra.mxu0 %v1147
    %1166 = vmatprep.subr.bf16.mxu0 0
    %1167 = vmatpush1.bf16.msra.mxu0 %v1148
    %1168 = vmatprep.subr.bf16.mxu0 0
    %1169 = vmatpush1.bf16.msra.mxu0 %v1149
    %1170 = vmatprep.subr.bf16.mxu0 0
    %1171 = vmatpush1.bf16.msra.mxu0 %v1150
    %1172 = vmatprep.subr.bf16.mxu0 0
    %1173 = vmatpush1.bf16.msra.mxu0 %v1151
    %1174 = vmatprep.subr.bf16.mxu0 0
    %1175 = vmatpush1.bf16.msra.mxu0 %v1152
    %1176 = vmatprep.subr.bf16.mxu0 0
    %1177 = vmatpush1.bf16.msra.mxu0 %v1153
    %1178 = vmatprep.subr.bf16.mxu0 0
    %1179 = vmatpush1.bf16.msra.mxu0 %v1154
    %1180 = vmatprep.subr.bf16.mxu0 0
    %1181 = vmatpush1.bf16.msra.mxu0 %v1155
    %1182 = vmatprep.subr.bf16.mxu0 0
    %1183 = vmatpush1.bf16.msra.mxu0 %v1156
    %1184 = vmatprep.subr.bf16.mxu0 0
    %1185 = vmatpush1.bf16.msra.mxu0 %v1157
    %1186 = vmatprep.subr.bf16.mxu0 0
    %1187 = vmatpush1.bf16.msra.mxu0 %v1158
    %1188 = vmatprep.subr.bf16.mxu0 0
    %1189 = vmatpush1.bf16.msra.mxu0 %v1159
    %1190 = vmatprep.subr.bf16.mxu0 0
    %1191 = vmatpush1.bf16.msra.mxu0 %v1160
    %1192 = vmatprep.subr.bf16.mxu0 0
    %1193 = vmatpush1.bf16.msra.mxu0 %v1161
    %1194 = vmatprep.mubr.bf16.mxu0 %v629
    %1195 = vmatmul.mubr.bf16.gmra.mrb[0].mxu0 %v628
    %v1196 = vpop.f32.mrb[0].mxu0
    %v1197 = vadd.f32 0.0, %v1196
    %v1198 = vpop.f32.mrb[0].mxu0
    %v1199 = vpop.f32.mrb[0].mxu0
    %v1200 = vadd.f32 0.0, %v1199
    %v1201 = vpop.f32.mrb[0].mxu0
    %1202 = vmatprep.mubr.bf16.mxu0 %v631
    %1203 = vmatmul.mubr.bf16.gmra.mrb[0].mxu0 %v630
    %v1204 = vpop.f32.mrb[0].mxu0
    %v1205 = vadd.f32 0.0, %v1204
    %v1206 = vpop.f32.mrb[0].mxu0
    %v1207 = vpop.f32.mrb[0].mxu0
    %v1208 = vadd.f32 0.0, %v1207
    %v1209 = vpop.f32.mrb[0].mxu0
    %1210 = vmatprep.mubr.bf16.mxu0 %v633
    %1211 = vmatmul.mubr.bf16.gmra.mrb[0].mxu0 %v632
    %v1212 = vpop.f32.mrb[0].mxu0
    %v1213 = vadd.f32 0.0, %v1212
    %v1214 = vpop.f32.mrb[0].mxu0
    %v1215 = vpop.f32.mrb[0].mxu0
    %v1216 = vadd.f32 0.0, %v1215
    %v1217 = vpop.f32.mrb[0].mxu0
    %1218 = vmatprep.mubr.bf16.mxu0 %v635
    %1219 = vmatmul.mubr.bf16.gmra.mrb[0].mxu0 %v634
    %v1220 = vpop.f32.mrb[0].mxu0
    %v1221 = vadd.f32 0.0, %v1220
    %v1222 = vpop.f32.mrb[0].mxu0
    %v1223 = vpop.f32.mrb[0].mxu0
    %v1224 = vadd.f32 0.0, %v1223
    %v1225 = vpop.f32.mrb[0].mxu0
    %1226 = vmatprep.mubr.bf16.mxu0 %v637
    %1227 = vmatmul.mubr.bf16.gmra.mrb[0].mxu0 %v636
    %v1228 = vpop.f32.mrb[0].mxu0
    %v1229 = vadd.f32 0.0, %v1228
    %v1230 = vpop.f32.mrb[0].mxu0
    %v1231 = vpop.f32.mrb[0].mxu0
    %v1232 = vadd.f32 0.0, %v1231
    %v1233 = vpop.f32.mrb[0].mxu0
    %1234 = vmatprep.mubr.bf16.mxu0 %v639
    %1235 = vmatmul.mubr.bf16.gmra.mrb[0].mxu0 %v638
    %v1236 = vpop.f32.mrb[0].mxu0
    %v1237 = vadd.f32 0.0, %v1236
    %v1238 = vpop.f32.mrb[0].mxu0
    %v1239 = vpop.f32.mrb[0].mxu0
    %v1240 = vadd.f32 0.0, %v1239
    %v1241 = vpop.f32.mrb[0].mxu0
    %1242 = vmatprep.mubr.bf16.mxu0 %v641
    %1243 = vmatmul.mubr.bf16.gmra.mrb[0].mxu0 %v640
    %v1244 = vpop.f32.mrb[0].mxu0
    %v1245 = vadd.f32 0.0, %v1244
    %v1246 = vpop.f32.mrb[0].mxu0
    %v1247 = vpop.f32.mrb[0].mxu0
    %v1248 = vadd.f32 0.0, %v1247
    %v1249 = vpop.f32.mrb[0].mxu0
    %1250 = vmatprep.mubr.bf16.mxu0 %v643
    %1251 = vmatmul.mubr.bf16.gmra.mrb[0].mxu0 %v642
    %v1252 = vpop.f32.mrb[0].mxu0
    %v1253 = vadd.f32 0.0, %v1252
    %v1254 = vpop.f32.mrb[0].mxu0
    %v1255 = vpop.f32.mrb[0].mxu0
    %v1256 = vadd.f32 0.0, %v1255
    %v1257 = vpop.f32.mrb[0].mxu0
    %1258 = vmatprep.mubr.bf16.mxu0 %v645
    %1259 = vmatmul.mubr.bf16.gmra.mrb[0].mxu0 %v644
    %v1260 = vpop.f32.mrb[0].mxu0
    %v1261 = vadd.f32 0.0, %v1260
    %v1262 = vpop.f32.mrb[0].mxu0
    %v1263 = vpop.f32.mrb[0].mxu0
    %v1264 = vadd.f32 0.0, %v1263
    %v1265 = vpop.f32.mrb[0].mxu0
    %1266 = vmatprep.mubr.bf16.mxu0 %v647
    %1267 = vmatmul.mubr.bf16.gmra.mrb[0].mxu0 %v646
    %v1268 = vpop.f32.mrb[0].mxu0
    %v1269 = vadd.f32 0.0, %v1268
    %v1270 = vpop.f32.mrb[0].mxu0
    %v1271 = vpop.f32.mrb[0].mxu0
    %v1272 = vadd.f32 0.0, %v1271
    %v1273 = vpop.f32.mrb[0].mxu0
    %1274 = vmatprep.mubr.bf16.mxu0 %v649
    %1275 = vmatmul.mubr.bf16.gmra.mrb[0].mxu0 %v648
    %v1276 = vpop.f32.mrb[0].mxu0
    %v1277 = vadd.f32 0.0, %v1276
    %v1278 = vpop.f32.mrb[0].mxu0
    %v1279 = vpop.f32.mrb[0].mxu0
    %v1280 = vadd.f32 0.0, %v1279
    %v1281 = vpop.f32.mrb[0].mxu0
    %1282 = vmatprep.mubr.bf16.mxu0 %v651
    %1283 = vmatmul.mubr.bf16.gmra.mrb[0].mxu0 %v650
    %v1284 = vpop.f32.mrb[0].mxu0
    %v1285 = vadd.f32 0.0, %v1284
    %v1286 = vpop.f32.mrb[0].mxu0
    %v1287 = vpop.f32.mrb[0].mxu0
    %v1288 = vadd.f32 0.0, %v1287
    %v1289 = vpop.f32.mrb[0].mxu0
    %1290 = vmatprep.mubr.bf16.mxu0 %v653
    %1291 = vmatmul.mubr.bf16.gmra.mrb[0].mxu0 %v652
    %v1292 = vpop.f32.mrb[0].mxu0
    %v1293 = vadd.f32 0.0, %v1292
    %v1294 = vpop.f32.mrb[0].mxu0
    %v1295 = vpop.f32.mrb[0].mxu0
    %v1296 = vadd.f32 0.0, %v1295
    %v1297 = vpop.f32.mrb[0].mxu0
    %1298 = vmatprep.mubr.bf16.mxu0 %v655
    %1299 = vmatmul.mubr.bf16.gmra.mrb[0].mxu0 %v654
    %v1300 = vpop.f32.mrb[0].mxu0
    %v1301 = vadd.f32 0.0, %v1300
    %v1302 = vpop.f32.mrb[0].mxu0
    %v1303 = vpop.f32.mrb[0].mxu0
    %v1304 = vadd.f32 0.0, %v1303
    %v1305 = vpop.f32.mrb[0].mxu0
    %1306 = vmatprep.mubr.bf16.mxu0 %v657
    %1307 = vmatmul.mubr.bf16.gmra.mrb[0].mxu0 %v656
    %v1308 = vpop.f32.mrb[0].mxu0
    %v1309 = vadd.f32 0.0, %v1308
    %v1310 = vpop.f32.mrb[0].mxu0
    %v1311 = vpop.f32.mrb[0].mxu0
    %v1312 = vadd.f32 0.0, %v1311
    %v1313 = vpop.f32.mrb[0].mxu0
    %1314 = vmatprep.mubr.bf16.mxu0 %v659
    %1315 = vmatmul.mubr.bf16.gmra.mrb[0].mxu0 %v658
    %v1316 = vpop.f32.mrb[0].mxu0
    %v1317 = vadd.f32 0.0, %v1316
    %v1318 = vpop.f32.mrb[0].mxu0
    %v1319 = vpop.f32.mrb[0].mxu0
    %v1320 = vadd.f32 0.0, %v1319
    %v1321 = vpop.f32.mrb[0].mxu0
    %1322 = vdwg.mxu0
    %v1323 = vpack.c.bf16 %v1200, %v1197
    %v1324 = vpack.c.bf16 %v1208, %v1205
    %v1325 = vpack.c.bf16 %v1216, %v1213
    %v1326 = vpack.c.bf16 %v1224, %v1221
    %v1327 = vpack.c.bf16 %v1232, %v1229
    %v1328 = vpack.c.bf16 %v1240, %v1237
    %v1329 = vpack.c.bf16 %v1248, %v1245
    %v1330 = vpack.c.bf16 %v1256, %v1253
    %v1331 = vpack.c.bf16 %v1264, %v1261
    %v1332 = vpack.c.bf16 %v1272, %v1269
    %v1333 = vpack.c.bf16 %v1280, %v1277
    %v1334 = vpack.c.bf16 %v1288, %v1285
    %v1335 = vpack.c.bf16 %v1296, %v1293
    %v1336 = vpack.c.bf16 %v1304, %v1301
    %v1337 = vpack.c.bf16 %v1312, %v1309
    %v1338 = vpack.c.bf16 %v1320, %v1317
    %1339 = vmatprep.subr.bf16.mxu0 0
    %1340 = vmatpush1.bf16.msra.mxu0 %v905
    %1341 = vmatprep.subr.bf16.mxu0 0
    %1342 = vmatpush1.bf16.msra.mxu0 %v906
    %1343 = vmatprep.subr.bf16.mxu0 0
    %1344 = vmatpush1.bf16.msra.mxu0 %v907
    %1345 = vmatprep.subr.bf16.mxu0 0
    %1346 = vmatpush1.bf16.msra.mxu0 %v908
    %1347 = vmatprep.subr.bf16.mxu0 0
    %1348 = vmatpush1.bf16.msra.mxu0 %v909
    %1349 = vmatprep.subr.bf16.mxu0 0
    %1350 = vmatpush1.bf16.msra.mxu0 %v910
    %1351 = vmatprep.subr.bf16.mxu0 0
    %1352 = vmatpush1.bf16.msra.mxu0 %v911
    %1353 = vmatprep.subr.bf16.mxu0 0
    %1354 = vmatpush1.bf16.msra.mxu0 %v912
    %1355 = vmatprep.subr.bf16.mxu0 0
    %1356 = vmatpush1.bf16.msra.mxu0 0
    %1357 = vmatprep.subr.bf16.mxu0 0
    %1358 = vmatpush1.bf16.msra.mxu0 0
    %1359 = vmatprep.subr.bf16.mxu0 0
    %1360 = vmatpush1.bf16.msra.mxu0 0
    %1361 = vmatprep.subr.bf16.mxu0 0
    %1362 = vmatpush1.bf16.msra.mxu0 0
    %1363 = vmatprep.subr.bf16.mxu0 0
    %1364 = vmatpush1.bf16.msra.mxu0 0
    %1365 = vmatprep.subr.bf16.mxu0 0
    %1366 = vmatpush1.bf16.msra.mxu0 0
    %1367 = vmatprep.subr.bf16.mxu0 0
    %1368 = vmatpush1.bf16.msra.mxu0 0
    %1369 = vmatprep.subr.bf16.mxu0 0
    %1370 = vmatpush1.bf16.msra.mxu0 0
    %1371 = vmatprep.mubr.bf16.mxu0 0
    %1372 = vmatmul.mubr.bf16.gmra.mrb[0].mxu0 %v1323
    %v1373 = vpop.f32.mrb[0].mxu0
    %v1374 = vadd.f32 %v872, %v1373
    %v1375 = vpop.f32.mrb[0].mxu0
    %v1376 = vpop.f32.mrb[0].mxu0
    %v1377 = vadd.f32 %v872, %v1376
    %v1378 = vpop.f32.mrb[0].mxu0
    %1379 = vmatprep.mubr.bf16.mxu0 0
    %1380 = vmatmul.mubr.bf16.gmra.mrb[0].mxu0 %v1324
    %v1381 = vpop.f32.mrb[0].mxu0
    %v1382 = vadd.f32 %v872, %v1381
    %v1383 = vpop.f32.mrb[0].mxu0
    %v1384 = vpop.f32.mrb[0].mxu0
    %v1385 = vadd.f32 %v872, %v1384
    %v1386 = vpop.f32.mrb[0].mxu0
    %1387 = vmatprep.mubr.bf16.mxu0 0
    %1388 = vmatmul.mubr.bf16.gmra.mrb[0].mxu0 %v1325
    %v1389 = vpop.f32.mrb[0].mxu0
    %v1390 = vadd.f32 %v872, %v1389
    %v1391 = vpop.f32.mrb[0].mxu0
    %v1392 = vpop.f32.mrb[0].mxu0
    %v1393 = vadd.f32 %v872, %v1392
    %v1394 = vpop.f32.mrb[0].mxu0
    %1395 = vmatprep.mubr.bf16.mxu0 0
    %1396 = vmatmul.mubr.bf16.gmra.mrb[0].mxu0 %v1326
    %v1397 = vpop.f32.mrb[0].mxu0
    %v1398 = vadd.f32 %v872, %v1397
    %v1399 = vpop.f32.mrb[0].mxu0
    %v1400 = vpop.f32.mrb[0].mxu0
    %v1401 = vadd.f32 %v872, %v1400
    %v1402 = vpop.f32.mrb[0].mxu0
    %1403 = vmatprep.mubr.bf16.mxu0 0
    %1404 = vmatmul.mubr.bf16.gmra.mrb[0].mxu0 %v1327
    %v1405 = vpop.f32.mrb[0].mxu0
    %v1406 = vadd.f32 %v872, %v1405
    %v1407 = vpop.f32.mrb[0].mxu0
    %v1408 = vpop.f32.mrb[0].mxu0
    %v1409 = vadd.f32 %v872, %v1408
    %v1410 = vpop.f32.mrb[0].mxu0
    %1411 = vmatprep.mubr.bf16.mxu0 0
    %1412 = vmatmul.mubr.bf16.gmra.mrb[0].mxu0 %v1328
    %v1413 = vpop.f32.mrb[0].mxu0
    %v1414 = vadd.f32 %v872, %v1413
    %v1415 = vpop.f32.mrb[0].mxu0
    %v1416 = vpop.f32.mrb[0].mxu0
    %v1417 = vadd.f32 %v872, %v1416
    %v1418 = vpop.f32.mrb[0].mxu0
    %1419 = vmatprep.mubr.bf16.mxu0 0
    %1420 = vmatmul.mubr.bf16.gmra.mrb[0].mxu0 %v1329
    %v1421 = vpop.f32.mrb[0].mxu0
    %v1422 = vadd.f32 %v872, %v1421
    %v1423 = vpop.f32.mrb[0].mxu0
    %v1424 = vpop.f32.mrb[0].mxu0
    %v1425 = vadd.f32 %v872, %v1424
    %v1426 = vpop.f32.mrb[0].mxu0
    %1427 = vmatprep.mubr.bf16.mxu0 0
    %1428 = vmatmul.mubr.bf16.gmra.mrb[0].mxu0 %v1330
    %v1429 = vpop.f32.mrb[0].mxu0
    %v1430 = vadd.f32 %v872, %v1429
    %v1431 = vpop.f32.mrb[0].mxu0
    %v1432 = vpop.f32.mrb[0].mxu0
    %v1433 = vadd.f32 %v872, %v1432
    %v1434 = vpop.f32.mrb[0].mxu0
    %1435 = vmatprep.mubr.bf16.mxu0 0
    %1436 = vmatmul.mubr.bf16.gmra.mrb[0].mxu0 %v1331
    %v1437 = vpop.f32.mrb[0].mxu0
    %v1438 = vadd.f32 %v872, %v1437
    %v1439 = vpop.f32.mrb[0].mxu0
    %v1440 = vpop.f32.mrb[0].mxu0
    %v1441 = vadd.f32 %v872, %v1440
    %v1442 = vpop.f32.mrb[0].mxu0
    %1443 = vmatprep.mubr.bf16.mxu0 0
    %1444 = vmatmul.mubr.bf16.gmra.mrb[0].mxu0 %v1332
    %v1445 = vpop.f32.mrb[0].mxu0
    %v1446 = vadd.f32 %v872, %v1445
    %v1447 = vpop.f32.mrb[0].mxu0
    %v1448 = vpop.f32.mrb[0].mxu0
    %v1449 = vadd.f32 %v872, %v1448
    %v1450 = vpop.f32.mrb[0].mxu0
    %1451 = vmatprep.mubr.bf16.mxu0 0
    %1452 = vmatmul.mubr.bf16.gmra.mrb[0].mxu0 %v1333
    %v1453 = vpop.f32.mrb[0].mxu0
    %v1454 = vadd.f32 %v872, %v1453
    %v1455 = vpop.f32.mrb[0].mxu0
    %v1456 = vpop.f32.mrb[0].mxu0
    %v1457 = vadd.f32 %v872, %v1456
    %v1458 = vpop.f32.mrb[0].mxu0
    %1459 = vmatprep.mubr.bf16.mxu0 0
    %1460 = vmatmul.mubr.bf16.gmra.mrb[0].mxu0 %v1334
    %v1461 = vpop.f32.mrb[0].mxu0
    %v1462 = vadd.f32 %v872, %v1461
    %v1463 = vpop.f32.mrb[0].mxu0
    %v1464 = vpop.f32.mrb[0].mxu0
    %v1465 = vadd.f32 %v872, %v1464
    %v1466 = vpop.f32.mrb[0].mxu0
    %1467 = vmatprep.mubr.bf16.mxu0 0
    %1468 = vmatmul.mubr.bf16.gmra.mrb[0].mxu0 %v1335
    %v1469 = vpop.f32.mrb[0].mxu0
    %v1470 = vadd.f32 %v872, %v1469
    %v1471 = vpop.f32.mrb[0].mxu0
    %v1472 = vpop.f32.mrb[0].mxu0
    %v1473 = vadd.f32 %v872, %v1472
    %v1474 = vpop.f32.mrb[0].mxu0
    %1475 = vmatprep.mubr.bf16.mxu0 0
    %1476 = vmatmul.mubr.bf16.gmra.mrb[0].mxu0 %v1336
    %v1477 = vpop.f32.mrb[0].mxu0
    %v1478 = vadd.f32 %v872, %v1477
    %v1479 = vpop.f32.mrb[0].mxu0
    %v1480 = vpop.f32.mrb[0].mxu0
    %v1481 = vadd.f32 %v872, %v1480
    %v1482 = vpop.f32.mrb[0].mxu0
    %1483 = vmatprep.mubr.bf16.mxu0 0
    %1484 = vmatmul.mubr.bf16.gmra.mrb[0].mxu0 %v1337
    %v1485 = vpop.f32.mrb[0].mxu0
    %v1486 = vadd.f32 %v872, %v1485
    %v1487 = vpop.f32.mrb[0].mxu0
    %v1488 = vpop.f32.mrb[0].mxu0
    %v1489 = vadd.f32 %v872, %v1488
    %v1490 = vpop.f32.mrb[0].mxu0
    %1491 = vmatprep.mubr.bf16.mxu0 0
    %1492 = vmatmul.mubr.bf16.gmra.mrb[0].mxu0 %v1338
    %v1493 = vpop.f32.mrb[0].mxu0
    %v1494 = vadd.f32 %v872, %v1493
    %v1495 = vpop.f32.mrb[0].mxu0
    %v1496 = vpop.f32.mrb[0].mxu0
    %v1497 = vadd.f32 %v872, %v1496
    %v1498 = vpop.f32.mrb[0].mxu0
    %1499 = vdwg.mxu0
    %v1500 = vadd.f32 %v1374, %v358
    %v1501 = vadd.f32 %v1377, %v361
    %v1502 = vadd.f32 %v1382, %v366
    %v1503 = vadd.f32 %v1385, %v369
    %v1504 = vadd.f32 %v1390, %v374
    %v1505 = vadd.f32 %v1393, %v377
    %v1506 = vadd.f32 %v1398, %v382
    %v1507 = vadd.f32 %v1401, %v385
    %v1508 = vadd.f32 %v1406, %v390
    %v1509 = vadd.f32 %v1409, %v393
    %v1510 = vadd.f32 %v1414, %v398
    %v1511 = vadd.f32 %v1417, %v401
    %v1512 = vadd.f32 %v1422, %v406
    %v1513 = vadd.f32 %v1425, %v409
    %v1514 = vadd.f32 %v1430, %v414
    %v1515 = vadd.f32 %v1433, %v417
    %v1516 = vadd.f32 %v1438, %v422
    %v1517 = vadd.f32 %v1441, %v425
    %v1518 = vadd.f32 %v1446, %v430
    %v1519 = vadd.f32 %v1449, %v433
    %v1520 = vadd.f32 %v1454, %v438
    %v1521 = vadd.f32 %v1457, %v441
    %v1522 = vadd.f32 %v1462, %v446
    %v1523 = vadd.f32 %v1465, %v449
    %v1524 = vadd.f32 %v1470, %v454
    %v1525 = vadd.f32 %v1473, %v457
    %v1526 = vadd.f32 %v1478, %v462
    %v1527 = vadd.f32 %v1481, %v465
    %v1528 = vadd.f32 %v1486, %v470
    %v1529 = vadd.f32 %v1489, %v473
    %v1530 = vadd.f32 %v1494, %v478
    %v1531 = vadd.f32 %v1497, %v481
    %v1532 = vmax.f32 %v1500, 0.0
    %v1533 = vmax.f32 %v1501, 0.0
    %v1534 = vmax.f32 %v1502, 0.0
    %v1535 = vmax.f32 %v1503, 0.0
    %v1536 = vmax.f32 %v1504, 0.0
    %v1537 = vmax.f32 %v1505, 0.0
    %v1538 = vmax.f32 %v1506, 0.0
    %v1539 = vmax.f32 %v1507, 0.0
    %v1540 = vmax.f32 %v1508, 0.0
    %v1541 = vmax.f32 %v1509, 0.0
    %v1542 = vmax.f32 %v1510, 0.0
    %v1543 = vmax.f32 %v1511, 0.0
    %v1544 = vmax.f32 %v1512, 0.0
    %v1545 = vmax.f32 %v1513, 0.0
    %v1546 = vmax.f32 %v1514, 0.0
    %v1547 = vmax.f32 %v1515, 0.0
    %v1548 = vmax.f32 %v1516, 0.0
    %v1549 = vmax.f32 %v1517, 0.0
    %v1550 = vmax.f32 %v1518, 0.0
    %v1551 = vmax.f32 %v1519, 0.0
    %v1552 = vmax.f32 %v1520, 0.0
    %v1553 = vmax.f32 %v1521, 0.0
    %v1554 = vmax.f32 %v1522, 0.0
    %v1555 = vmax.f32 %v1523, 0.0
    %v1556 = vmax.f32 %v1524, 0.0
    %v1557 = vmax.f32 %v1525, 0.0
    %v1558 = vmax.f32 %v1526, 0.0
    %v1559 = vmax.f32 %v1527, 0.0
    %v1560 = vmax.f32 %v1528, 0.0
    %v1561 = vmax.f32 %v1529, 0.0
    %v1562 = vmax.f32 %v1530, 0.0
    %v1563 = vmax.f32 %v1531, 0.0
    %v1564 = vpack.c.bf16 %v1533, %v1532
    %v1565 = vpack.c.bf16 %v1535, %v1534
    %v1566 = vpack.c.bf16 %v1537, %v1536
    %v1567 = vpack.c.bf16 %v1539, %v1538
    %v1568 = vpack.c.bf16 %v1541, %v1540
    %v1569 = vpack.c.bf16 %v1543, %v1542
    %v1570 = vpack.c.bf16 %v1545, %v1544
    %v1571 = vpack.c.bf16 %v1547, %v1546
    %v1572 = vpack.c.bf16 %v1549, %v1548
    %v1573 = vpack.c.bf16 %v1551, %v1550
    %v1574 = vpack.c.bf16 %v1553, %v1552
    %v1575 = vpack.c.bf16 %v1555, %v1554
    %v1576 = vpack.c.bf16 %v1557, %v1556
    %v1577 = vpack.c.bf16 %v1559, %v1558
    %v1578 = vpack.c.bf16 %v1561, %v1560
    %v1579 = vpack.c.bf16 %v1563, %v1562
    %1580 = vmatprep.subr.bf16.mxu0 0
    %1581 = vmatpush1.bf16.msra.mxu0 %v1564
    %1582 = vmatprep.subr.bf16.mxu0 0
    %1583 = vmatpush1.bf16.msra.mxu0 %v1565
    %1584 = vmatprep.subr.bf16.mxu0 0
    %1585 = vmatpush1.bf16.msra.mxu0 %v1566
    %1586 = vmatprep.subr.bf16.mxu0 0
    %1587 = vmatpush1.bf16.msra.mxu0 %v1567
    %1588 = vmatprep.subr.bf16.mxu0 0
    %1589 = vmatpush1.bf16.msra.mxu0 %v1568
    %1590 = vmatprep.subr.bf16.mxu0 0
    %1591 = vmatpush1.bf16.msra.mxu0 %v1569
    %1592 = vmatprep.subr.bf16.mxu0 0
    %1593 = vmatpush1.bf16.msra.mxu0 %v1570
    %1594 = vmatprep.subr.bf16.mxu0 0
    %1595 = vmatpush1.bf16.msra.mxu0 %v1571
    %1596 = vmatprep.subr.bf16.mxu0 0
    %1597 = vmatpush1.bf16.msra.mxu0 %v1572
    %1598 = vmatprep.subr.bf16.mxu0 0
    %1599 = vmatpush1.bf16.msra.mxu0 %v1573
    %1600 = vmatprep.subr.bf16.mxu0 0
    %1601 = vmatpush1.bf16.msra.mxu0 %v1574
    %1602 = vmatprep.subr.bf16.mxu0 0
    %1603 = vmatpush1.bf16.msra.mxu0 %v1575
    %1604 = vmatprep.subr.bf16.mxu0 0
    %1605 = vmatpush1.bf16.msra.mxu0 %v1576
    %1606 = vmatprep.subr.bf16.mxu0 0
    %1607 = vmatpush1.bf16.msra.mxu0 %v1577
    %1608 = vmatprep.subr.bf16.mxu0 0
    %1609 = vmatpush1.bf16.msra.mxu0 %v1578
    %1610 = vmatprep.subr.bf16.mxu0 0
    %1611 = vmatpush1.bf16.msra.mxu0 %v1579
    %1612 = vmatprep.mubr.bf16.mxu0 %v629
    %1613 = vmatmul.mubr.bf16.gmra.mrb[0].mxu0 %v628
    %v1614 = vpop.f32.mrb[0].mxu0
    %v1615 = vadd.f32 0.0, %v1614
    %v1616 = vpop.f32.mrb[0].mxu0
    %v1617 = vpop.f32.mrb[0].mxu0
    %v1618 = vadd.f32 0.0, %v1617
    %v1619 = vpop.f32.mrb[0].mxu0
    %1620 = vmatprep.mubr.bf16.mxu0 %v631
    %1621 = vmatmul.mubr.bf16.gmra.mrb[0].mxu0 %v630
    %v1622 = vpop.f32.mrb[0].mxu0
    %v1623 = vadd.f32 0.0, %v1622
    %v1624 = vpop.f32.mrb[0].mxu0
    %v1625 = vpop.f32.mrb[0].mxu0
    %v1626 = vadd.f32 0.0, %v1625
    %v1627 = vpop.f32.mrb[0].mxu0
    %1628 = vmatprep.mubr.bf16.mxu0 %v633
    %1629 = vmatmul.mubr.bf16.gmra.mrb[0].mxu0 %v632
    %v1630 = vpop.f32.mrb[0].mxu0
    %v1631 = vadd.f32 0.0, %v1630
    %v1632 = vpop.f32.mrb[0].mxu0
    %v1633 = vpop.f32.mrb[0].mxu0
    %v1634 = vadd.f32 0.0, %v1633
    %v1635 = vpop.f32.mrb[0].mxu0
    %1636 = vmatprep.mubr.bf16.mxu0 %v635
    %1637 = vmatmul.mubr.bf16.gmra.mrb[0].mxu0 %v634
    %v1638 = vpop.f32.mrb[0].mxu0
    %v1639 = vadd.f32 0.0, %v1638
    %v1640 = vpop.f32.mrb[0].mxu0
    %v1641 = vpop.f32.mrb[0].mxu0
    %v1642 = vadd.f32 0.0, %v1641
    %v1643 = vpop.f32.mrb[0].mxu0
    %1644 = vmatprep.mubr.bf16.mxu0 %v637
    %1645 = vmatmul.mubr.bf16.gmra.mrb[0].mxu0 %v636
    %v1646 = vpop.f32.mrb[0].mxu0
    %v1647 = vadd.f32 0.0, %v1646
    %v1648 = vpop.f32.mrb[0].mxu0
    %v1649 = vpop.f32.mrb[0].mxu0
    %v1650 = vadd.f32 0.0, %v1649
    %v1651 = vpop.f32.mrb[0].mxu0
    %1652 = vmatprep.mubr.bf16.mxu0 %v639
    %1653 = vmatmul.mubr.bf16.gmra.mrb[0].mxu0 %v638
    %v1654 = vpop.f32.mrb[0].mxu0
    %v1655 = vadd.f32 0.0, %v1654
    %v1656 = vpop.f32.mrb[0].mxu0
    %v1657 = vpop.f32.mrb[0].mxu0
    %v1658 = vadd.f32 0.0, %v1657
    %v1659 = vpop.f32.mrb[0].mxu0
    %1660 = vmatprep.mubr.bf16.mxu0 %v641
    %1661 = vmatmul.mubr.bf16.gmra.mrb[0].mxu0 %v640
    %v1662 = vpop.f32.mrb[0].mxu0
    %v1663 = vadd.f32 0.0, %v1662
    %v1664 = vpop.f32.mrb[0].mxu0
    %v1665 = vpop.f32.mrb[0].mxu0
    %v1666 = vadd.f32 0.0, %v1665
    %v1667 = vpop.f32.mrb[0].mxu0
    %1668 = vmatprep.mubr.bf16.mxu0 %v643
    %1669 = vmatmul.mubr.bf16.gmra.mrb[0].mxu0 %v642
    %v1670 = vpop.f32.mrb[0].mxu0
    %v1671 = vadd.f32 0.0, %v1670
    %v1672 = vpop.f32.mrb[0].mxu0
    %v1673 = vpop.f32.mrb[0].mxu0
    %v1674 = vadd.f32 0.0, %v1673
    %v1675 = vpop.f32.mrb[0].mxu0
    %1676 = vmatprep.mubr.bf16.mxu0 %v645
    %1677 = vmatmul.mubr.bf16.gmra.mrb[0].mxu0 %v644
    %v1678 = vpop.f32.mrb[0].mxu0
    %v1679 = vadd.f32 0.0, %v1678
    %v1680 = vpop.f32.mrb[0].mxu0
    %v1681 = vpop.f32.mrb[0].mxu0
    %v1682 = vadd.f32 0.0, %v1681
    %v1683 = vpop.f32.mrb[0].mxu0
    %1684 = vmatprep.mubr.bf16.mxu0 %v647
    %1685 = vmatmul.mubr.bf16.gmra.mrb[0].mxu0 %v646
    %v1686 = vpop.f32.mrb[0].mxu0
    %v1687 = vadd.f32 0.0, %v1686
    %v1688 = vpop.f32.mrb[0].mxu0
    %v1689 = vpop.f32.mrb[0].mxu0
    %v1690 = vadd.f32 0.0, %v1689
    %v1691 = vpop.f32.mrb[0].mxu0
    %1692 = vmatprep.mubr.bf16.mxu0 %v649
    %1693 = vmatmul.mubr.bf16.gmra.mrb[0].mxu0 %v648
    %v1694 = vpop.f32.mrb[0].mxu0
    %v1695 = vadd.f32 0.0, %v1694
    %v1696 = vpop.f32.mrb[0].mxu0
    %v1697 = vpop.f32.mrb[0].mxu0
    %v1698 = vadd.f32 0.0, %v1697
    %v1699 = vpop.f32.mrb[0].mxu0
    %1700 = vmatprep.mubr.bf16.mxu0 %v651
    %1701 = vmatmul.mubr.bf16.gmra.mrb[0].mxu0 %v650
    %v1702 = vpop.f32.mrb[0].mxu0
    %v1703 = vadd.f32 0.0, %v1702
    %v1704 = vpop.f32.mrb[0].mxu0
    %v1705 = vpop.f32.mrb[0].mxu0
    %v1706 = vadd.f32 0.0, %v1705
    %v1707 = vpop.f32.mrb[0].mxu0
    %1708 = vmatprep.mubr.bf16.mxu0 %v653
    %1709 = vmatmul.mubr.bf16.gmra.mrb[0].mxu0 %v652
    %v1710 = vpop.f32.mrb[0].mxu0
    %v1711 = vadd.f32 0.0, %v1710
    %v1712 = vpop.f32.mrb[0].mxu0
    %v1713 = vpop.f32.mrb[0].mxu0
    %v1714 = vadd.f32 0.0, %v1713
    %v1715 = vpop.f32.mrb[0].mxu0
    %1716 = vmatprep.mubr.bf16.mxu0 %v655
    %1717 = vmatmul.mubr.bf16.gmra.mrb[0].mxu0 %v654
    %v1718 = vpop.f32.mrb[0].mxu0
    %v1719 = vadd.f32 0.0, %v1718
    %v1720 = vpop.f32.mrb[0].mxu0
    %v1721 = vpop.f32.mrb[0].mxu0
    %v1722 = vadd.f32 0.0, %v1721
    %v1723 = vpop.f32.mrb[0].mxu0
    %1724 = vmatprep.mubr.bf16.mxu0 %v657
    %1725 = vmatmul.mubr.bf16.gmra.mrb[0].mxu0 %v656
    %v1726 = vpop.f32.mrb[0].mxu0
    %v1727 = vadd.f32 0.0, %v1726
    %v1728 = vpop.f32.mrb[0].mxu0
    %v1729 = vpop.f32.mrb[0].mxu0
    %v1730 = vadd.f32 0.0, %v1729
    %v1731 = vpop.f32.mrb[0].mxu0
    %1732 = vmatprep.mubr.bf16.mxu0 %v659
    %1733 = vmatmul.mubr.bf16.gmra.mrb[0].mxu0 %v658
    %v1734 = vpop.f32.mrb[0].mxu0
    %v1735 = vadd.f32 0.0, %v1734
    %v1736 = vpop.f32.mrb[0].mxu0
    %v1737 = vpop.f32.mrb[0].mxu0
    %v1738 = vadd.f32 0.0, %v1737
    %v1739 = vpop.f32.mrb[0].mxu0
    %1740 = vdwg.mxu0
    %v1741 = vpack.c.bf16 %v1618, %v1615
    %v1742 = vpack.c.bf16 %v1626, %v1623
    %v1743 = vpack.c.bf16 %v1634, %v1631
    %v1744 = vpack.c.bf16 %v1642, %v1639
    %v1745 = vpack.c.bf16 %v1650, %v1647
    %v1746 = vpack.c.bf16 %v1658, %v1655
    %v1747 = vpack.c.bf16 %v1666, %v1663
    %v1748 = vpack.c.bf16 %v1674, %v1671
    %v1749 = vpack.c.bf16 %v1682, %v1679
    %v1750 = vpack.c.bf16 %v1690, %v1687
    %v1751 = vpack.c.bf16 %v1698, %v1695
    %v1752 = vpack.c.bf16 %v1706, %v1703
    %v1753 = vpack.c.bf16 %v1714, %v1711
    %v1754 = vpack.c.bf16 %v1722, %v1719
    %v1755 = vpack.c.bf16 %v1730, %v1727
    %v1756 = vpack.c.bf16 %v1738, %v1735
    %1757 = vmatprep.subr.bf16.mxu0 0
    %1758 = vmatpush1.bf16.msra.mxu0 %v905
    %1759 = vmatprep.subr.bf16.mxu0 0
    %1760 = vmatpush1.bf16.msra.mxu0 %v906
    %1761 = vmatprep.subr.bf16.mxu0 0
    %1762 = vmatpush1.bf16.msra.mxu0 %v907
    %1763 = vmatprep.subr.bf16.mxu0 0
    %1764 = vmatpush1.bf16.msra.mxu0 %v908
    %1765 = vmatprep.subr.bf16.mxu0 0
    %1766 = vmatpush1.bf16.msra.mxu0 %v909
    %1767 = vmatprep.subr.bf16.mxu0 0
    %1768 = vmatpush1.bf16.msra.mxu0 %v910
    %1769 = vmatprep.subr.bf16.mxu0 0
    %1770 = vmatpush1.bf16.msra.mxu0 %v911
    %1771 = vmatprep.subr.bf16.mxu0 0
    %1772 = vmatpush1.bf16.msra.mxu0 %v912
    %1773 = vmatprep.subr.bf16.mxu0 0
    %1774 = vmatpush1.bf16.msra.mxu0 0
    %1775 = vmatprep.subr.bf16.mxu0 0
    %1776 = vmatpush1.bf16.msra.mxu0 0
    %1777 = vmatprep.subr.bf16.mxu0 0
    %1778 = vmatpush1.bf16.msra.mxu0 0
    %1779 = vmatprep.subr.bf16.mxu0 0
    %1780 = vmatpush1.bf16.msra.mxu0 0
    %1781 = vmatprep.subr.bf16.mxu0 0
    %1782 = vmatpush1.bf16.msra.mxu0 0
    %1783 = vmatprep.subr.bf16.mxu0 0
    %1784 = vmatpush1.bf16.msra.mxu0 0
    %1785 = vmatprep.subr.bf16.mxu0 0
    %1786 = vmatpush1.bf16.msra.mxu0 0
    %1787 = vmatprep.subr.bf16.mxu0 0
    %1788 = vmatpush1.bf16.msra.mxu0 0
    %1789 = vmatprep.mubr.bf16.mxu0 0
    %1790 = vmatmul.mubr.bf16.gmra.mrb[0].mxu0 %v1741
    %v1791 = vpop.f32.mrb[0].mxu0
    %v1792 = vadd.f32 %v872, %v1791
    %v1793 = vpop.f32.mrb[0].mxu0
    %v1794 = vpop.f32.mrb[0].mxu0
    %v1795 = vadd.f32 %v872, %v1794
    %v1796 = vpop.f32.mrb[0].mxu0
    %1797 = vmatprep.mubr.bf16.mxu0 0
    %1798 = vmatmul.mubr.bf16.gmra.mrb[0].mxu0 %v1742
    %v1799 = vpop.f32.mrb[0].mxu0
    %v1800 = vadd.f32 %v872, %v1799
    %v1801 = vpop.f32.mrb[0].mxu0
    %v1802 = vpop.f32.mrb[0].mxu0
    %v1803 = vadd.f32 %v872, %v1802
    %v1804 = vpop.f32.mrb[0].mxu0
    %1805 = vmatprep.mubr.bf16.mxu0 0
    %1806 = vmatmul.mubr.bf16.gmra.mrb[0].mxu0 %v1743
    %v1807 = vpop.f32.mrb[0].mxu0
    %v1808 = vadd.f32 %v872, %v1807
    %v1809 = vpop.f32.mrb[0].mxu0
    %v1810 = vpop.f32.mrb[0].mxu0
    %v1811 = vadd.f32 %v872, %v1810
    %v1812 = vpop.f32.mrb[0].mxu0
    %1813 = vmatprep.mubr.bf16.mxu0 0
    %1814 = vmatmul.mubr.bf16.gmra.mrb[0].mxu0 %v1744
    %v1815 = vpop.f32.mrb[0].mxu0
    %v1816 = vadd.f32 %v872, %v1815
    %v1817 = vpop.f32.mrb[0].mxu0
    %v1818 = vpop.f32.mrb[0].mxu0
    %v1819 = vadd.f32 %v872, %v1818
    %v1820 = vpop.f32.mrb[0].mxu0
    %1821 = vmatprep.mubr.bf16.mxu0 0
    %1822 = vmatmul.mubr.bf16.gmra.mrb[0].mxu0 %v1745
    %v1823 = vpop.f32.mrb[0].mxu0
    %v1824 = vadd.f32 %v872, %v1823
    %v1825 = vpop.f32.mrb[0].mxu0
    %v1826 = vpop.f32.mrb[0].mxu0
    %v1827 = vadd.f32 %v872, %v1826
    %v1828 = vpop.f32.mrb[0].mxu0
    %1829 = vmatprep.mubr.bf16.mxu0 0
    %1830 = vmatmul.mubr.bf16.gmra.mrb[0].mxu0 %v1746
    %v1831 = vpop.f32.mrb[0].mxu0
    %v1832 = vadd.f32 %v872, %v1831
    %v1833 = vpop.f32.mrb[0].mxu0
    %v1834 = vpop.f32.mrb[0].mxu0
    %v1835 = vadd.f32 %v872, %v1834
    %v1836 = vpop.f32.mrb[0].mxu0
    %1837 = vmatprep.mubr.bf16.mxu0 0
    %1838 = vmatmul.mubr.bf16.gmra.mrb[0].mxu0 %v1747
    %v1839 = vpop.f32.mrb[0].mxu0
    %v1840 = vadd.f32 %v872, %v1839
    %v1841 = vpop.f32.mrb[0].mxu0
    %v1842 = vpop.f32.mrb[0].mxu0
    %v1843 = vadd.f32 %v872, %v1842
    %v1844 = vpop.f32.mrb[0].mxu0
    %1845 = vmatprep.mubr.bf16.mxu0 0
    %1846 = vmatmul.mubr.bf16.gmra.mrb[0].mxu0 %v1748
    %v1847 = vpop.f32.mrb[0].mxu0
    %v1848 = vadd.f32 %v872, %v1847
    %v1849 = vpop.f32.mrb[0].mxu0
    %v1850 = vpop.f32.mrb[0].mxu0
    %v1851 = vadd.f32 %v872, %v1850
    %v1852 = vpop.f32.mrb[0].mxu0
    %1853 = vmatprep.mubr.bf16.mxu0 0
    %1854 = vmatmul.mubr.bf16.gmra.mrb[0].mxu0 %v1749
    %v1855 = vpop.f32.mrb[0].mxu0
    %v1856 = vadd.f32 %v872, %v1855
    %v1857 = vpop.f32.mrb[0].mxu0
    %v1858 = vpop.f32.mrb[0].mxu0
    %v1859 = vadd.f32 %v872, %v1858
    %v1860 = vpop.f32.mrb[0].mxu0
    %1861 = vmatprep.mubr.bf16.mxu0 0
    %1862 = vmatmul.mubr.bf16.gmra.mrb[0].mxu0 %v1750
    %v1863 = vpop.f32.mrb[0].mxu0
    %v1864 = vadd.f32 %v872, %v1863
    %v1865 = vpop.f32.mrb[0].mxu0
    %v1866 = vpop.f32.mrb[0].mxu0
    %v1867 = vadd.f32 %v872, %v1866
    %v1868 = vpop.f32.mrb[0].mxu0
    %1869 = vmatprep.mubr.bf16.mxu0 0
    %1870 = vmatmul.mubr.bf16.gmra.mrb[0].mxu0 %v1751
    %v1871 = vpop.f32.mrb[0].mxu0
    %v1872 = vadd.f32 %v872, %v1871
    %v1873 = vpop.f32.mrb[0].mxu0
    %v1874 = vpop.f32.mrb[0].mxu0
    %v1875 = vadd.f32 %v872, %v1874
    %v1876 = vpop.f32.mrb[0].mxu0
    %1877 = vmatprep.mubr.bf16.mxu0 0
    %1878 = vmatmul.mubr.bf16.gmra.mrb[0].mxu0 %v1752
    %v1879 = vpop.f32.mrb[0].mxu0
    %v1880 = vadd.f32 %v872, %v1879
    %v1881 = vpop.f32.mrb[0].mxu0
    %v1882 = vpop.f32.mrb[0].mxu0
    %v1883 = vadd.f32 %v872, %v1882
    %v1884 = vpop.f32.mrb[0].mxu0
    %1885 = vmatprep.mubr.bf16.mxu0 0
    %1886 = vmatmul.mubr.bf16.gmra.mrb[0].mxu0 %v1753
    %v1887 = vpop.f32.mrb[0].mxu0
    %v1888 = vadd.f32 %v872, %v1887
    %v1889 = vpop.f32.mrb[0].mxu0
    %v1890 = vpop.f32.mrb[0].mxu0
    %v1891 = vadd.f32 %v872, %v1890
    %v1892 = vpop.f32.mrb[0].mxu0
    %1893 = vmatprep.mubr.bf16.mxu0 0
    %1894 = vmatmul.mubr.bf16.gmra.mrb[0].mxu0 %v1754
    %v1895 = vpop.f32.mrb[0].mxu0
    %v1896 = vadd.f32 %v872, %v1895
    %v1897 = vpop.f32.mrb[0].mxu0
    %v1898 = vpop.f32.mrb[0].mxu0
    %v1899 = vadd.f32 %v872, %v1898
    %v1900 = vpop.f32.mrb[0].mxu0
    %1901 = vmatprep.mubr.bf16.mxu0 0
    %1902 = vmatmul.mubr.bf16.gmra.mrb[0].mxu0 %v1755
    %v1903 = vpop.f32.mrb[0].mxu0
    %v1904 = vadd.f32 %v872, %v1903
    %v1905 = vpop.f32.mrb[0].mxu0
    %v1906 = vpop.f32.mrb[0].mxu0
    %v1907 = vadd.f32 %v872, %v1906
    %v1908 = vpop.f32.mrb[0].mxu0
    %1909 = vmatprep.mubr.bf16.mxu0 0
    %1910 = vmatmul.mubr.bf16.gmra.mrb[0].mxu0 %v1756
    %v1911 = vpop.f32.mrb[0].mxu0
    %v1912 = vadd.f32 %v872, %v1911
    %v1913 = vpop.f32.mrb[0].mxu0
    %v1914 = vpop.f32.mrb[0].mxu0
    %v1915 = vadd.f32 %v872, %v1914
    %v1916 = vpop.f32.mrb[0].mxu0
    %1917 = vdwg.mxu0
    %v1918 = vadd.f32 %v1792, %v358
    %v1919 = vadd.f32 %v1795, %v361
    %v1920 = vadd.f32 %v1800, %v366
    %v1921 = vadd.f32 %v1803, %v369
    %v1922 = vadd.f32 %v1808, %v374
    %v1923 = vadd.f32 %v1811, %v377
    %v1924 = vadd.f32 %v1816, %v382
    %v1925 = vadd.f32 %v1819, %v385
    %v1926 = vadd.f32 %v1824, %v390
    %v1927 = vadd.f32 %v1827, %v393
    %v1928 = vadd.f32 %v1832, %v398
    %v1929 = vadd.f32 %v1835, %v401
    %v1930 = vadd.f32 %v1840, %v406
    %v1931 = vadd.f32 %v1843, %v409
    %v1932 = vadd.f32 %v1848, %v414
    %v1933 = vadd.f32 %v1851, %v417
    %v1934 = vadd.f32 %v1856, %v422
    %v1935 = vadd.f32 %v1859, %v425
    %v1936 = vadd.f32 %v1864, %v430
    %v1937 = vadd.f32 %v1867, %v433
    %v1938 = vadd.f32 %v1872, %v438
    %v1939 = vadd.f32 %v1875, %v441
    %v1940 = vadd.f32 %v1880, %v446
    %v1941 = vadd.f32 %v1883, %v449
    %v1942 = vadd.f32 %v1888, %v454
    %v1943 = vadd.f32 %v1891, %v457
    %v1944 = vadd.f32 %v1896, %v462
    %v1945 = vadd.f32 %v1899, %v465
    %v1946 = vadd.f32 %v1904, %v470
    %v1947 = vadd.f32 %v1907, %v473
    %v1948 = vadd.f32 %v1912, %v478
    %v1949 = vadd.f32 %v1915, %v481
    %v1950 = vmax.f32 %v1918, 0.0
    %v1951 = vmax.f32 %v1919, 0.0
    %v1952 = vmax.f32 %v1920, 0.0
    %v1953 = vmax.f32 %v1921, 0.0
    %v1954 = vmax.f32 %v1922, 0.0
    %v1955 = vmax.f32 %v1923, 0.0
    %v1956 = vmax.f32 %v1924, 0.0
    %v1957 = vmax.f32 %v1925, 0.0
    %v1958 = vmax.f32 %v1926, 0.0
    %v1959 = vmax.f32 %v1927, 0.0
    %v1960 = vmax.f32 %v1928, 0.0
    %v1961 = vmax.f32 %v1929, 0.0
    %v1962 = vmax.f32 %v1930, 0.0
    %v1963 = vmax.f32 %v1931, 0.0
    %v1964 = vmax.f32 %v1932, 0.0
    %v1965 = vmax.f32 %v1933, 0.0
    %v1966 = vmax.f32 %v1934, 0.0
    %v1967 = vmax.f32 %v1935, 0.0
    %v1968 = vmax.f32 %v1936, 0.0
    %v1969 = vmax.f32 %v1937, 0.0
    %v1970 = vmax.f32 %v1938, 0.0
    %v1971 = vmax.f32 %v1939, 0.0
    %v1972 = vmax.f32 %v1940, 0.0
    %v1973 = vmax.f32 %v1941, 0.0
    %v1974 = vmax.f32 %v1942, 0.0
    %v1975 = vmax.f32 %v1943, 0.0
    %v1976 = vmax.f32 %v1944, 0.0
    %v1977 = vmax.f32 %v1945, 0.0
    %v1978 = vmax.f32 %v1946, 0.0
    %v1979 = vmax.f32 %v1947, 0.0
    %v1980 = vmax.f32 %v1948, 0.0
    %v1981 = vmax.f32 %v1949, 0.0
    %v1982 = vpack.c.bf16 %v1951, %v1950
    %v1983 = vpack.c.bf16 %v1953, %v1952
    %v1984 = vpack.c.bf16 %v1955, %v1954
    %v1985 = vpack.c.bf16 %v1957, %v1956
    %v1986 = vpack.c.bf16 %v1959, %v1958
    %v1987 = vpack.c.bf16 %v1961, %v1960
    %v1988 = vpack.c.bf16 %v1963, %v1962
    %v1989 = vpack.c.bf16 %v1965, %v1964
    %v1990 = vpack.c.bf16 %v1967, %v1966
    %v1991 = vpack.c.bf16 %v1969, %v1968
    %v1992 = vpack.c.bf16 %v1971, %v1970
    %v1993 = vpack.c.bf16 %v1973, %v1972
    %v1994 = vpack.c.bf16 %v1975, %v1974
    %v1995 = vpack.c.bf16 %v1977, %v1976
    %v1996 = vpack.c.bf16 %v1979, %v1978
    %v1997 = vpack.c.bf16 %v1981, %v1980
    %v1998 = vlaneseq
    %v1999 = vshrl.u32 %v1998, 7
    %v2000 = vsub.s32 2, %v1999
    %v2001 = vrot.slane %v119, %v2000
    %v2018 = vunpack.c.l.b16 %v67
    %v2019 = vunpack.c.l.b16 %v68
    %v2020 = vunpack.c.l.b16 %v69
    %v2021 = vunpack.c.l.b16 %v70
    %v2022 = vunpack.c.l.b16 %v71
    %v2023 = vunpack.c.l.b16 %v72
    %v2024 = vunpack.c.l.b16 %v73
    %v2025 = vunpack.c.l.b16 %v74
    %v2026 = vunpack.c.l.b16 %v75
    %v2027 = vunpack.c.l.b16 %v76
    %v2028 = vunpack.c.l.b16 %v77
    %v2029 = vunpack.c.l.b16 %v78
    %v2030 = vunpack.c.l.b16 %v79
    %v2031 = vunpack.c.l.b16 %v80
    %v2032 = vunpack.c.l.b16 %v81
    %v2033 = vunpack.c.l.b16 %v82
    %v2034 = vpack.c.b16 %v2019, %v2018
    %v2035 = vpack.c.b16 %v2021, %v2020
    %v2036 = vpack.c.b16 %v2023, %v2022
    %v2037 = vpack.c.b16 %v2025, %v2024
    %v2038 = vpack.c.b16 %v2027, %v2026
    %v2039 = vpack.c.b16 %v2029, %v2028
    %v2040 = vpack.c.b16 %v2031, %v2030
    %v2041 = vpack.c.b16 %v2033, %v2032
    %2050 = vmatprep.subr.bf16.mxu0 0
    %2051 = vmatpush1.bf16.msra.mxu0 %v2034
    %2052 = vmatprep.subr.bf16.mxu0 0
    %2053 = vmatpush1.bf16.msra.mxu0 %v2035
    %2054 = vmatprep.subr.bf16.mxu0 0
    %2055 = vmatpush1.bf16.msra.mxu0 %v2036
    %2056 = vmatprep.subr.bf16.mxu0 0
    %2057 = vmatpush1.bf16.msra.mxu0 %v2037
    %2058 = vmatprep.subr.bf16.mxu0 0
    %2059 = vmatpush1.bf16.msra.mxu0 %v2038
    %2060 = vmatprep.subr.bf16.mxu0 0
    %2061 = vmatpush1.bf16.msra.mxu0 %v2039
    %2062 = vmatprep.subr.bf16.mxu0 0
    %2063 = vmatpush1.bf16.msra.mxu0 %v2040
    %2064 = vmatprep.subr.bf16.mxu0 0
    %2065 = vmatpush1.bf16.msra.mxu0 %v2041
    %2066 = vmatprep.subr.bf16.mxu0 0
    %2067 = vmatpush1.bf16.msra.mxu0 0
    %2068 = vmatprep.subr.bf16.mxu0 0
    %2069 = vmatpush1.bf16.msra.mxu0 0
    %2070 = vmatprep.subr.bf16.mxu0 0
    %2071 = vmatpush1.bf16.msra.mxu0 0
    %2072 = vmatprep.subr.bf16.mxu0 0
    %2073 = vmatpush1.bf16.msra.mxu0 0
    %2074 = vmatprep.subr.bf16.mxu0 0
    %2075 = vmatpush1.bf16.msra.mxu0 0
    %2076 = vmatprep.subr.bf16.mxu0 0
    %2077 = vmatpush1.bf16.msra.mxu0 0
    %2078 = vmatprep.subr.bf16.mxu0 0
    %2079 = vmatpush1.bf16.msra.mxu0 0
    %2080 = vmatprep.subr.bf16.mxu0 0
    %2081 = vmatpush1.bf16.msra.mxu0 0
    %2082 = vmatprep.mubr.bf16.mxu0 0
    %2083 = vmatmul.mubr.bf16.gmra.mrb[0].mxu0 %v1982
    %v2084 = vpop.f32.mrb[0].mxu0
    %v2085 = vadd.f32 %v2001, %v2084
    %v2086 = vpop.f32.mrb[0].mxu0
    %v2087 = vpop.f32.mrb[0].mxu0
    %v2088 = vadd.f32 %v2001, %v2087
    %v2089 = vpop.f32.mrb[0].mxu0
    %2090 = vmatprep.mubr.bf16.mxu0 0
    %2091 = vmatmul.mubr.bf16.gmra.mrb[0].mxu0 %v1983
    %v2092 = vpop.f32.mrb[0].mxu0
    %v2093 = vadd.f32 %v2001, %v2092
    %v2094 = vpop.f32.mrb[0].mxu0
    %v2095 = vpop.f32.mrb[0].mxu0
    %v2096 = vadd.f32 %v2001, %v2095
    %v2097 = vpop.f32.mrb[0].mxu0
    %2098 = vmatprep.mubr.bf16.mxu0 0
    %2099 = vmatmul.mubr.bf16.gmra.mrb[0].mxu0 %v1984
    %v2100 = vpop.f32.mrb[0].mxu0
    %v2101 = vadd.f32 %v2001, %v2100
    %v2102 = vpop.f32.mrb[0].mxu0
    %v2103 = vpop.f32.mrb[0].mxu0
    %v2104 = vadd.f32 %v2001, %v2103
    %v2105 = vpop.f32.mrb[0].mxu0
    %2106 = vmatprep.mubr.bf16.mxu0 0
    %2107 = vmatmul.mubr.bf16.gmra.mrb[0].mxu0 %v1985
    %v2108 = vpop.f32.mrb[0].mxu0
    %v2109 = vadd.f32 %v2001, %v2108
    %v2110 = vpop.f32.mrb[0].mxu0
    %v2111 = vpop.f32.mrb[0].mxu0
    %v2112 = vadd.f32 %v2001, %v2111
    %v2113 = vpop.f32.mrb[0].mxu0
    %2114 = vmatprep.mubr.bf16.mxu0 0
    %2115 = vmatmul.mubr.bf16.gmra.mrb[0].mxu0 %v1986
    %v2116 = vpop.f32.mrb[0].mxu0
    %v2117 = vadd.f32 %v2001, %v2116
    %v2118 = vpop.f32.mrb[0].mxu0
    %v2119 = vpop.f32.mrb[0].mxu0
    %v2120 = vadd.f32 %v2001, %v2119
    %v2121 = vpop.f32.mrb[0].mxu0
    %2122 = vmatprep.mubr.bf16.mxu0 0
    %2123 = vmatmul.mubr.bf16.gmra.mrb[0].mxu0 %v1987
    %v2124 = vpop.f32.mrb[0].mxu0
    %v2125 = vadd.f32 %v2001, %v2124
    %v2126 = vpop.f32.mrb[0].mxu0
    %v2127 = vpop.f32.mrb[0].mxu0
    %v2128 = vadd.f32 %v2001, %v2127
    %v2129 = vpop.f32.mrb[0].mxu0
    %2130 = vmatprep.mubr.bf16.mxu0 0
    %2131 = vmatmul.mubr.bf16.gmra.mrb[0].mxu0 %v1988
    %v2132 = vpop.f32.mrb[0].mxu0
    %v2133 = vadd.f32 %v2001, %v2132
    %v2134 = vpop.f32.mrb[0].mxu0
    %v2135 = vpop.f32.mrb[0].mxu0
    %v2136 = vadd.f32 %v2001, %v2135
    %v2137 = vpop.f32.mrb[0].mxu0
    %2138 = vmatprep.mubr.bf16.mxu0 0
    %2139 = vmatmul.mubr.bf16.gmra.mrb[0].mxu0 %v1989
    %v2140 = vpop.f32.mrb[0].mxu0
    %v2141 = vadd.f32 %v2001, %v2140
    %v2142 = vpop.f32.mrb[0].mxu0
    %v2143 = vpop.f32.mrb[0].mxu0
    %v2144 = vadd.f32 %v2001, %v2143
    %v2145 = vpop.f32.mrb[0].mxu0
    %2146 = vmatprep.mubr.bf16.mxu0 0
    %2147 = vmatmul.mubr.bf16.gmra.mrb[0].mxu0 %v1990
    %v2148 = vpop.f32.mrb[0].mxu0
    %v2149 = vadd.f32 %v2001, %v2148
    %v2150 = vpop.f32.mrb[0].mxu0
    %v2151 = vpop.f32.mrb[0].mxu0
    %v2152 = vadd.f32 %v2001, %v2151
    %v2153 = vpop.f32.mrb[0].mxu0
    %2154 = vmatprep.mubr.bf16.mxu0 0
    %2155 = vmatmul.mubr.bf16.gmra.mrb[0].mxu0 %v1991
    %v2156 = vpop.f32.mrb[0].mxu0
    %v2157 = vadd.f32 %v2001, %v2156
    %v2158 = vpop.f32.mrb[0].mxu0
    %v2159 = vpop.f32.mrb[0].mxu0
    %v2160 = vadd.f32 %v2001, %v2159
    %v2161 = vpop.f32.mrb[0].mxu0
    %2162 = vmatprep.mubr.bf16.mxu0 0
    %2163 = vmatmul.mubr.bf16.gmra.mrb[0].mxu0 %v1992
    %v2164 = vpop.f32.mrb[0].mxu0
    %v2165 = vadd.f32 %v2001, %v2164
    %v2166 = vpop.f32.mrb[0].mxu0
    %v2167 = vpop.f32.mrb[0].mxu0
    %v2168 = vadd.f32 %v2001, %v2167
    %v2169 = vpop.f32.mrb[0].mxu0
    %2170 = vmatprep.mubr.bf16.mxu0 0
    %2171 = vmatmul.mubr.bf16.gmra.mrb[0].mxu0 %v1993
    %v2172 = vpop.f32.mrb[0].mxu0
    %v2173 = vadd.f32 %v2001, %v2172
    %v2174 = vpop.f32.mrb[0].mxu0
    %v2175 = vpop.f32.mrb[0].mxu0
    %v2176 = vadd.f32 %v2001, %v2175
    %v2177 = vpop.f32.mrb[0].mxu0
    %2178 = vmatprep.mubr.bf16.mxu0 0
    %2179 = vmatmul.mubr.bf16.gmra.mrb[0].mxu0 %v1994
    %v2180 = vpop.f32.mrb[0].mxu0
    %v2181 = vadd.f32 %v2001, %v2180
    %v2182 = vpop.f32.mrb[0].mxu0
    %v2183 = vpop.f32.mrb[0].mxu0
    %v2184 = vadd.f32 %v2001, %v2183
    %v2185 = vpop.f32.mrb[0].mxu0
    %2186 = vmatprep.mubr.bf16.mxu0 0
    %2187 = vmatmul.mubr.bf16.gmra.mrb[0].mxu0 %v1995
    %v2188 = vpop.f32.mrb[0].mxu0
    %v2189 = vadd.f32 %v2001, %v2188
    %v2190 = vpop.f32.mrb[0].mxu0
    %v2191 = vpop.f32.mrb[0].mxu0
    %v2192 = vadd.f32 %v2001, %v2191
    %v2193 = vpop.f32.mrb[0].mxu0
    %2194 = vmatprep.mubr.bf16.mxu0 0
    %2195 = vmatmul.mubr.bf16.gmra.mrb[0].mxu0 %v1996
    %v2196 = vpop.f32.mrb[0].mxu0
    %v2197 = vadd.f32 %v2001, %v2196
    %v2198 = vpop.f32.mrb[0].mxu0
    %v2199 = vpop.f32.mrb[0].mxu0
    %v2200 = vadd.f32 %v2001, %v2199
    %v2201 = vpop.f32.mrb[0].mxu0
    %2202 = vmatprep.mubr.bf16.mxu0 0
    %2203 = vmatmul.mubr.bf16.gmra.mrb[0].mxu0 %v1997
    %v2204 = vpop.f32.mrb[0].mxu0
    %v2205 = vadd.f32 %v2001, %v2204
    %v2206 = vpop.f32.mrb[0].mxu0
    %v2207 = vpop.f32.mrb[0].mxu0
    %v2208 = vadd.f32 %v2001, %v2207
    %v2209 = vpop.f32.mrb[0].mxu0
    %2210 = vdwg.mxu0
    %v2211 = vmax.f32 %v2085, 0.0
    %v2212 = vmax.f32 %v2088, 0.0
    %v2213 = vmax.f32 %v2093, 0.0
    %v2214 = vmax.f32 %v2096, 0.0
    %v2215 = vmax.f32 %v2101, 0.0
    %v2216 = vmax.f32 %v2104, 0.0
    %v2217 = vmax.f32 %v2109, 0.0
    %v2218 = vmax.f32 %v2112, 0.0
    %v2219 = vmax.f32 %v2117, 0.0
    %v2220 = vmax.f32 %v2120, 0.0
    %v2221 = vmax.f32 %v2125, 0.0
    %v2222 = vmax.f32 %v2128, 0.0
    %v2223 = vmax.f32 %v2133, 0.0
    %v2224 = vmax.f32 %v2136, 0.0
    %v2225 = vmax.f32 %v2141, 0.0
    %v2226 = vmax.f32 %v2144, 0.0
    %v2227 = vmax.f32 %v2149, 0.0
    %v2228 = vmax.f32 %v2152, 0.0
    %v2229 = vmax.f32 %v2157, 0.0
    %v2230 = vmax.f32 %v2160, 0.0
    %v2231 = vmax.f32 %v2165, 0.0
    %v2232 = vmax.f32 %v2168, 0.0
    %v2233 = vmax.f32 %v2173, 0.0
    %v2234 = vmax.f32 %v2176, 0.0
    %v2235 = vmax.f32 %v2181, 0.0
    %v2236 = vmax.f32 %v2184, 0.0
    %v2237 = vmax.f32 %v2189, 0.0
    %v2238 = vmax.f32 %v2192, 0.0
    %v2239 = vmax.f32 %v2197, 0.0
    %v2240 = vmax.f32 %v2200, 0.0
    %v2241 = vmax.f32 %v2205, 0.0
    %v2242 = vmax.f32 %v2208, 0.0
    %v2243 = vpack.c.bf16 %v2212, %v2211
    %v2244 = vpack.c.bf16 %v2214, %v2213
    %v2245 = vpack.c.bf16 %v2216, %v2215
    %v2246 = vpack.c.bf16 %v2218, %v2217
    %v2247 = vpack.c.bf16 %v2220, %v2219
    %v2248 = vpack.c.bf16 %v2222, %v2221
    %v2249 = vpack.c.bf16 %v2224, %v2223
    %v2250 = vpack.c.bf16 %v2226, %v2225
    %v2251 = vpack.c.bf16 %v2228, %v2227
    %v2252 = vpack.c.bf16 %v2230, %v2229
    %v2253 = vpack.c.bf16 %v2232, %v2231
    %v2254 = vpack.c.bf16 %v2234, %v2233
    %v2255 = vpack.c.bf16 %v2236, %v2235
    %v2256 = vpack.c.bf16 %v2238, %v2237
    %v2257 = vpack.c.bf16 %v2240, %v2239
    %v2258 = vpack.c.bf16 %v2242, %v2241
    %v2261 = vunpack.c.l.b16 %v184
    %v2262 = vunpack.c.h.b16 %v184
    %v2263 = vunpack.c.l.b16 %v185
    %v2264 = vunpack.c.h.b16 %v185
    %v2265 = vpack.c.b16 %v2263, %v2261
    %v2266 = vpack.c.b16 %v2264, %v2262
    %2269 = vmatprep.subr.bf16.mxu0 0
    %2270 = vmatpush1.bf16.msra.mxu0 %v2243
    %2271 = vmatprep.subr.bf16.mxu0 0
    %2272 = vmatpush1.bf16.msra.mxu0 %v2244
    %2273 = vmatprep.subr.bf16.mxu0 0
    %2274 = vmatpush1.bf16.msra.mxu0 %v2245
    %2275 = vmatprep.subr.bf16.mxu0 0
    %2276 = vmatpush1.bf16.msra.mxu0 %v2246
    %2277 = vmatprep.subr.bf16.mxu0 0
    %2278 = vmatpush1.bf16.msra.mxu0 %v2247
    %2279 = vmatprep.subr.bf16.mxu0 0
    %2280 = vmatpush1.bf16.msra.mxu0 %v2248
    %2281 = vmatprep.subr.bf16.mxu0 0
    %2282 = vmatpush1.bf16.msra.mxu0 %v2249
    %2283 = vmatprep.subr.bf16.mxu0 0
    %2284 = vmatpush1.bf16.msra.mxu0 %v2250
    %2285 = vmatprep.subr.bf16.mxu0 0
    %2286 = vmatpush1.bf16.msra.mxu0 %v2251
    %2287 = vmatprep.subr.bf16.mxu0 0
    %2288 = vmatpush1.bf16.msra.mxu0 %v2252
    %2289 = vmatprep.subr.bf16.mxu0 0
    %2290 = vmatpush1.bf16.msra.mxu0 %v2253
    %2291 = vmatprep.subr.bf16.mxu0 0
    %2292 = vmatpush1.bf16.msra.mxu0 %v2254
    %2293 = vmatprep.subr.bf16.mxu0 0
    %2294 = vmatpush1.bf16.msra.mxu0 %v2255
    %2295 = vmatprep.subr.bf16.mxu0 0
    %2296 = vmatpush1.bf16.msra.mxu0 %v2256
    %2297 = vmatprep.subr.bf16.mxu0 0
    %2298 = vmatpush1.bf16.msra.mxu0 %v2257
    %2299 = vmatprep.subr.bf16.mxu0 0
    %2300 = vmatpush1.bf16.msra.mxu0 %v2258
    %2301 = vmatprep.mubr.bf16.mxu0 %v2266
    %2302 = vmatmul.mubr.bf16.gmra.mrb[0].mxu0 %v2265
    %v2303 = vpop.f32.mrb[0].mxu0
    %v2304 = vadd.f32 0.0, %v2303
    %v2305 = vpop.f32.mrb[0].mxu0
    %v2306 = vpop.f32.mrb[0].mxu0
    %v2307 = vadd.f32 0.0, %v2306
    %v2308 = vpop.f32.mrb[0].mxu0
    %2309 = vdwg.mxu0
    %v2310 = vmax.f32 %v2304, 0.0
    %v2311 = vmax.f32 %v2307, 0.0
    %v2312 = vpack.c.bf16 %v2311, %v2310
    %v2313 = vlaneseq
    %v2314 = vshrl.u32 %v2313, 7
    %v2315 = vsub.s32 3, %v2314
    %v2316 = vrot.slane %v119, %v2315
    %v2333 = vunpack.c.l.b16 %v83
    %v2334 = vunpack.c.l.b16 %v84
    %v2335 = vunpack.c.l.b16 %v85
    %v2336 = vunpack.c.l.b16 %v86
    %v2337 = vunpack.c.l.b16 %v87
    %v2338 = vunpack.c.l.b16 %v88
    %v2339 = vunpack.c.l.b16 %v89
    %v2340 = vunpack.c.l.b16 %v90
    %v2341 = vunpack.c.l.b16 %v91
    %v2342 = vunpack.c.l.b16 %v92
    %v2343 = vunpack.c.l.b16 %v93
    %v2344 = vunpack.c.l.b16 %v94
    %v2345 = vunpack.c.l.b16 %v95
    %v2346 = vunpack.c.l.b16 %v96
    %v2347 = vunpack.c.l.b16 %v97
    %v2348 = vunpack.c.l.b16 %v98
    %v2349 = vpack.c.b16 %v2334, %v2333
    %v2350 = vpack.c.b16 %v2336, %v2335
    %v2351 = vpack.c.b16 %v2338, %v2337
    %v2352 = vpack.c.b16 %v2340, %v2339
    %v2353 = vpack.c.b16 %v2342, %v2341
    %v2354 = vpack.c.b16 %v2344, %v2343
    %v2355 = vpack.c.b16 %v2346, %v2345
    %v2356 = vpack.c.b16 %v2348, %v2347
    %2365 = vmatprep.subr.bf16.mxu0 0
    %2366 = vmatpush1.bf16.msra.mxu0 %v2349
    %2367 = vmatprep.subr.bf16.mxu0 0
    %2368 = vmatpush1.bf16.msra.mxu0 %v2350
    %2369 = vmatprep.subr.bf16.mxu0 0
    %2370 = vmatpush1.bf16.msra.mxu0 %v2351
    %2371 = vmatprep.subr.bf16.mxu0 0
    %2372 = vmatpush1.bf16.msra.mxu0 %v2352
    %2373 = vmatprep.subr.bf16.mxu0 0
    %2374 = vmatpush1.bf16.msra.mxu0 %v2353
    %2375 = vmatprep.subr.bf16.mxu0 0
    %2376 = vmatpush1.bf16.msra.mxu0 %v2354
    %2377 = vmatprep.subr.bf16.mxu0 0
    %2378 = vmatpush1.bf16.msra.mxu0 %v2355
    %2379 = vmatprep.subr.bf16.mxu0 0
    %2380 = vmatpush1.bf16.msra.mxu0 %v2356
    %2381 = vmatprep.subr.bf16.mxu0 0
    %2382 = vmatpush1.bf16.msra.mxu0 0
    %2383 = vmatprep.subr.bf16.mxu0 0
    %2384 = vmatpush1.bf16.msra.mxu0 0
    %2385 = vmatprep.subr.bf16.mxu0 0
    %2386 = vmatpush1.bf16.msra.mxu0 0
    %2387 = vmatprep.subr.bf16.mxu0 0
    %2388 = vmatpush1.bf16.msra.mxu0 0
    %2389 = vmatprep.subr.bf16.mxu0 0
    %2390 = vmatpush1.bf16.msra.mxu0 0
    %2391 = vmatprep.subr.bf16.mxu0 0
    %2392 = vmatpush1.bf16.msra.mxu0 0
    %2393 = vmatprep.subr.bf16.mxu0 0
    %2394 = vmatpush1.bf16.msra.mxu0 0
    %2395 = vmatprep.subr.bf16.mxu0 0
    %2396 = vmatpush1.bf16.msra.mxu0 0
    %2397 = vmatprep.mubr.bf16.mxu0 0
    %2398 = vmatmul.mubr.bf16.gmra.mrb[0].mxu0 %v2312
    %v2399 = vpop.f32.mrb[0].mxu0
    %v2400 = vadd.f32 %v2316, %v2399
    %v2401 = vpop.f32.mrb[0].mxu0
    %v2402 = vpop.f32.mrb[0].mxu0
    %v2403 = vadd.f32 %v2316, %v2402
    %v2404 = vpop.f32.mrb[0].mxu0
    %2405 = vdwg.mxu0
    %v2406 = vmax.f32 %v2400, 0.0
    %v2407 = vmax.f32 %v2403, 0.0
    %v2408 = vpack.c.bf16 %v2407, %v2406
    %v2409 = vlaneseq
    %v2410 = vshrl.u32 %v2409, 7
    %v2411 = vsub.s32 4, %v2410
    %v2412 = vrot.slane %v119, %v2411
    %v2429 = vunpack.c.l.b16 %v99
    %v2430 = vunpack.c.l.b16 %v100
    %v2431 = vunpack.c.l.b16 %v101
    %v2432 = vunpack.c.l.b16 %v102
    %v2433 = vunpack.c.l.b16 %v103
    %v2434 = vunpack.c.l.b16 %v104
    %v2435 = vunpack.c.l.b16 %v105
    %v2436 = vunpack.c.l.b16 %v106
    %v2437 = vunpack.c.l.b16 %v107
    %v2438 = vunpack.c.l.b16 %v108
    %v2439 = vunpack.c.l.b16 %v109
    %v2440 = vunpack.c.l.b16 %v110
    %v2441 = vunpack.c.l.b16 %v111
    %v2442 = vunpack.c.l.b16 %v112
    %v2443 = vunpack.c.l.b16 %v113
    %v2444 = vunpack.c.l.b16 %v114
    %v2445 = vpack.c.b16 %v2430, %v2429
    %v2446 = vpack.c.b16 %v2432, %v2431
    %v2447 = vpack.c.b16 %v2434, %v2433
    %v2448 = vpack.c.b16 %v2436, %v2435
    %v2449 = vpack.c.b16 %v2438, %v2437
    %v2450 = vpack.c.b16 %v2440, %v2439
    %v2451 = vpack.c.b16 %v2442, %v2441
    %v2452 = vpack.c.b16 %v2444, %v2443
    %2461 = vmatprep.subr.bf16.mxu0 0
    %2462 = vmatpush1.bf16.msra.mxu0 %v2445
    %2463 = vmatprep.subr.bf16.mxu0 0
    %2464 = vmatpush1.bf16.msra.mxu0 %v2446
    %2465 = vmatprep.subr.bf16.mxu0 0
    %2466 = vmatpush1.bf16.msra.mxu0 %v2447
    %2467 = vmatprep.subr.bf16.mxu0 0
    %2468 = vmatpush1.bf16.msra.mxu0 %v2448
    %2469 = vmatprep.subr.bf16.mxu0 0
    %2470 = vmatpush1.bf16.msra.mxu0 %v2449
    %2471 = vmatprep.subr.bf16.mxu0 0
    %2472 = vmatpush1.bf16.msra.mxu0 %v2450
    %2473 = vmatprep.subr.bf16.mxu0 0
    %2474 = vmatpush1.bf16.msra.mxu0 %v2451
    %2475 = vmatprep.subr.bf16.mxu0 0
    %2476 = vmatpush1.bf16.msra.mxu0 %v2452
    %2477 = vmatprep.subr.bf16.mxu0 0
    %2478 = vmatpush1.bf16.msra.mxu0 0
    %2479 = vmatprep.subr.bf16.mxu0 0
    %2480 = vmatpush1.bf16.msra.mxu0 0
    %2481 = vmatprep.subr.bf16.mxu0 0
    %2482 = vmatpush1.bf16.msra.mxu0 0
    %2483 = vmatprep.subr.bf16.mxu0 0
    %2484 = vmatpush1.bf16.msra.mxu0 0
    %2485 = vmatprep.subr.bf16.mxu0 0
    %2486 = vmatpush1.bf16.msra.mxu0 0
    %2487 = vmatprep.subr.bf16.mxu0 0
    %2488 = vmatpush1.bf16.msra.mxu0 0
    %2489 = vmatprep.subr.bf16.mxu0 0
    %2490 = vmatpush1.bf16.msra.mxu0 0
    %2491 = vmatprep.subr.bf16.mxu0 0
    %2492 = vmatpush1.bf16.msra.mxu0 0
    %2493 = vmatprep.mubr.bf16.mxu0 0
    %2494 = vmatmul.mubr.bf16.gmra.mrb[0].mxu0 %v2408
    %v2495 = vpop.f32.mrb[0].mxu0
    %v2496 = vadd.f32 %v2412, %v2495
    %v2497 = vpop.f32.mrb[0].mxu0
    %v2498 = vpop.f32.mrb[0].mxu0
    %v2499 = vadd.f32 %v2412, %v2498
    %v2500 = vpop.f32.mrb[0].mxu0
    %2501 = vdwg.mxu0
    %v2502 = vlaneseq
    %v2503 = vand.u32 %v2502, 127
    %vm2504 = vcmp.lt.s32.totalorder %v2503, 2
    %v2505 = vsel %vm2504, %v2496, -1e+30
    %v2506 = vsel %vm2504, %v2499, -1e+30
    %2507 = vmax.xlane.f32.xlu0 %v2505
    %v2508 = vpop.xlane.xlu0 %2507
    %2509 = vmax.xlane.f32.xlu0 %v2506
    %v2510 = vpop.xlane.xlu0 %2509
    %v2511 = vsub.f32 %v2505, %v2508
    %v2512 = vsub.f32 %v2506, %v2510
    %v2513 = vmul.f32 %v2511, 1.442695
    %v2514 = vpow.pop %v2513
    %v2515 = vmul.f32 %v2512, 1.442695
    %v2516 = vpow.pop %v2515
    %2517 = vadd.xlane.f32.xlu0 %v2514
    %v2518 = vpop.xlane.xlu0 %2517
    %2519 = vadd.xlane.f32.xlu0 %v2516
    %v2520 = vpop.xlane.xlu0 %2519
    %v2521 = vlog2.pop %v2518
    %v2522 = vmul.f32 %v2521, 0.6931472
    %v2523 = vlog2.pop %v2520
    %v2524 = vmul.f32 %v2523, 0.6931472
    %v2525 = vadd.f32 %v2508, %v2522
    %v2526 = vadd.f32 %v2510, %v2524
    %v2527 = vsub.f32 %v2505, %v2525
    %v2528 = vsub.f32 %v2506, %v2526
    %v2529 = vld [vmem:[%s3] sm:$0xff]
    %v2530 = vld [vmem:[%s3 + $0x8] sm:$0xff]
    %v2531 = vmul.f32 %v2529, %v2527
    %v2532 = vmul.f32 %v2530, %v2528
    %2533 = vadd.xlane.f32.xlu0 %v2531
    %v2534 = vpop.xlane.xlu0 %2533
    %2535 = vadd.xlane.f32.xlu0 %v2532
    %v2536 = vpop.xlane.xlu0 %2535
    %v2537 = vsub.f32 0.0, %v2534
    %v2538 = vsub.f32 0.0, %v2536
    %2539 = vmax.xlane.f32.xlu0 %v2527
    %v2540 = vpop.xlane.xlu0 %2539
    %2541 = vmax.xlane.f32.xlu0 %v2528
    %v2542 = vpop.xlane.xlu0 %2541
    %vm2543 = vcmp.eq.f32.partialorder %v2527, %v2540
    %vm2544 = vcmp.eq.f32.partialorder %v2528, %v2542
    %v2545 = vsel %vm2543, %v2503, 128
    %v2546 = vsel %vm2544, %v2503, 128
    %v2547 = vand.u32 %v2545, 65535
    %v2548 = vshra.s32 %v2545, 16
    %v2549 = vcvt.s32.f32 %v2547
    %v2550 = vcvt.s32.f32 %v2548
    %2551 = vmin.xlane.f32.xlu0 %v2550
    %v2552 = vpop.xlane.xlu0 %2551
    %vm2553 = vcmp.eq.f32.partialorder %v2550, %v2552
    %v2554 = vsel %vm2553, %v2549, inf
    %2555 = vmin.xlane.f32.xlu0 %v2554
    %v2556 = vpop.xlane.xlu0 %2555
    %v2557 = vcvt.f32.s32 %v2556
    %v2558 = vcvt.f32.s32 %v2552
    %v2559 = vshll.u32 %v2558, 16
    %v2560 = vadd.s32 %v2559, %v2557
    %v2561 = vand.u32 %v2546, 65535
    %v2562 = vshra.s32 %v2546, 16
    %v2563 = vcvt.s32.f32 %v2561
    %v2564 = vcvt.s32.f32 %v2562
    %2565 = vmin.xlane.f32.xlu0 %v2564
    %v2566 = vpop.xlane.xlu0 %2565
    %vm2567 = vcmp.eq.f32.partialorder %v2564, %v2566
    %v2568 = vsel %vm2567, %v2563, inf
    %2569 = vmin.xlane.f32.xlu0 %v2568
    %v2570 = vpop.xlane.xlu0 %2569
    %v2571 = vcvt.f32.s32 %v2570
    %v2572 = vcvt.f32.s32 %v2566
    %v2573 = vshll.u32 %v2572, 16
    %v2574 = vadd.s32 %v2573, %v2571
    %vm2575 = vcmp.gt.f32.partialorder %v2529, 0.5
    %vm2576 = vcmp.gt.f32.partialorder %v2530, 0.5
    %v2577 = vsel %vm2575, %v2503, 0
    %v2578 = vsel %vm2576, %v2503, 0
    %v2579 = vand.u32 %v2577, 65535
    %v2580 = vshrl.u32 %v2577, 16
    %v2581 = vcvt.s32.f32 %v2579
    %v2582 = vcvt.s32.f32 %v2580
    %2583 = vadd.xlane.f32.xlu0 %v2581
    %v2584 = vpop.xlane.xlu0 %2583
    %2585 = vadd.xlane.f32.xlu0 %v2582
    %v2586 = vpop.xlane.xlu0 %2585
    %v2587 = vcvt.f32.s32 %v2584
    %v2588 = vcvt.f32.s32 %v2586
    %v2589 = vshll.u32 %v2588, 16
    %v2590 = vadd.s32 %v2589, %v2587
    %v2591 = vand.u32 %v2578, 65535
    %v2592 = vshrl.u32 %v2578, 16
    %v2593 = vcvt.s32.f32 %v2591
    %v2594 = vcvt.s32.f32 %v2592
    %2595 = vadd.xlane.f32.xlu0 %v2593
    %v2596 = vpop.xlane.xlu0 %2595
    %2597 = vadd.xlane.f32.xlu0 %v2594
    %v2598 = vpop.xlane.xlu0 %2597
    %v2599 = vcvt.f32.s32 %v2596
    %v2600 = vcvt.f32.s32 %v2598
    %v2601 = vshll.u32 %v2600, 16
    %v2602 = vadd.s32 %v2601, %v2599
    %vm2603 = vcmp.eq.s32.totalorder %v2560, %v2590
    %vm2604 = vcmp.eq.s32.totalorder %v2574, %v2602
    %v2605 = vsel %vm2603, 1, 0
    %v2606 = vsel %vm2604, 1, 0
    %v2607 = vcvt.s32.f32 %v2605
    %v2608 = vcvt.s32.f32 %v2606
    %vm2609 = vcmp.eq.s32.totalorder %v2503, 2
    %vm2610 = vcmp.eq.s32.totalorder %v2503, 3
    %v2611 = vsel %vm2610, %v2607, 0.0
    %v2612 = vsel %vm2610, %v2608, 0.0
    %v2613 = vsel %vm2609, %v2537, %v2611
    %v2614 = vsel %vm2609, %v2538, %v2612
    %v2615 = vsel %vm2504, %v2527, %v2613
    %v2616 = vsel %vm2504, %v2528, %v2614
    %2617 = vst [vmem:[#allocation7] sm:$0xff] %v2615
    %2618 = vst [vmem:[#allocation7 + $0x8] sm:$0xff] %v2616
    // Predicated region
    $region30: #{tpu_custom_call.1} parent=1 // pred_check
      _
    $region31: #{tpu_custom_call.1} parent=1 // pred_check_branch
      %2620 = sbr.rel (0) target = $region33
    $region32: #{tpu_custom_call.1} parent=1 // pred_region
      %s2622 = ssub.s32 256, 256
      %2623 = vsyncadd [#allocation4], %s2622
      %s2624 = sshll.u32 [#allocation7], 4
      %s2625 = int_to_ptr.vmem [resolvable:$true] %s2624
      %2630 = dma.vmem_to_hbm [thread:$0]  %s2625, 256, %s5, [#allocation4], 128, 128, 8
    $region33: #{tpu_custom_call.1} parent=1 // pred_fallthru
      _
    // Predicated region
    $region34: #{tpu_custom_call.1} parent=1 // pred_check
      _
    $region35: #{tpu_custom_call.1} parent=1 // pred_check_branch
      %2632 = sbr.rel (0) target = $region37
    $region36: #{tpu_custom_call.1} parent=1 // pred_region
      %2633 = dma.done [#allocation4], 256
    $region37: #{tpu_custom_call.1} parent=1 // pred_fallthru
      _
    %2634 = vsyncpa [#allocation3], 1
    %2635 = vsyncpa [#allocation6], 1
    %2636 = vsyncpa [#allocation4], 1

</llo_original>
